<compile_context>
chip_gen: v5e
topology: v5e:2x2
jax: 0.10.0
libtpu: 0.0.40
codegen_flags: <defaults>
</compile_context>

<pallas_src>
import functools

import jax
import jax.numpy as jnp
from jax.experimental import pallas as pl
from jax.experimental.pallas import tpu as pltpu  # noqa: F401  (TPU backend import)

HID = 32
HEADS = 4
HEAD_DIM = HID // HEADS
MAX_REL = 2                  # max_relative_position in the PyTorch module
N_REL = 2 * MAX_REL + 1      # number of clipped-distance buckets
B = 2
L = 8                        # len_q == len_k == len_v


# ----------------------------- Pallas kernel ------------------------------- #
def mha_kernel(xcat_ref, wqkv_ref, bqkv_ref, wo_ref, bo_ref,
               rkT_ref, rv_ref, oh_ref, bmask_ref, o_ref,
               *, n_heads, head_dim, hid_dim, n_rel):
    """Single invocation: everything (B folded into rows) lives in VMEM."""
    # --- fused Q|K|V projection: one MXU push, 96-lane-wide result ---
    qkv = jnp.dot(xcat_ref[...], wqkv_ref[...],
                  preferred_element_type=jnp.float32) + bqkv_ref[...]

    inv_scale = jnp.float32(1.0 / (head_dim ** 0.5))
    q = qkv[:, :hid_dim] * inv_scale            # fold 1/sqrt(D) into q once
    k = qkv[:, hid_dim:2 * hid_dim]
    v = qkv[:, 2 * hid_dim:3 * hid_dim]

    bmask = bmask_ref[...]                      # (BL, BL) additive block-diag batch mask
    rkT = rkT_ref[...]                          # (D, n_rel) rel-key table, transposed
    rv = rv_ref[...]                            # (n_rel, D) rel-value table
    wo = wo_ref[...]                            # (HID, HID)
    oh_tiles = [oh_ref[c] for c in range(n_rel)]   # n_rel x (BL, BL) one-hot distance masks

    out = None
    for h in range(n_heads):                    # static unrolled loop over heads
        lo = h * head_dim
        qh = q[:, lo:lo + head_dim]             # (BL, D)
        kh = k[:, lo:lo + head_dim]
        vh = v[:, lo:lo + head_dim]

        # content-content scores (cross-batch entries masked below)
        s = jnp.einsum('qd,kd->qk', qh, kh, preferred_element_type=jnp.float32)

        # content-position scores, Shaw table form:
        #   pk[i, c] = q_i . rel_k_table[c];  attn2[i, j] = pk[i, idx(i, j)]
        pk = jnp.dot(qh, rkT, preferred_element_type=jnp.float32)   # (BL, n_rel)
        for c in range(n_rel):
            s = s + pk[:, c:c + 1] * oh_tiles[c]
        s = s + bmask

        # softmax over keys (f32)
        m = jnp.max(s, axis=-1, keepdims=True)
        e = jnp.exp(s - m)
        p = e * pl.reciprocal(jnp.sum(e, axis=-1, keepdims=True), approx=True)
        # TODO(synk): dropout is identity (eval mode); optional user `mask` arg not supported.

        # attention-weighted values + Shaw position-weighted values
        w = jnp.dot(p, vh, preferred_element_type=jnp.float32)      # (BL, D)
        for c in range(n_rel):
            w = w + jnp.sum(p * oh_tiles[c], axis=-1, keepdims=True) * rv[c:c + 1, :]

        # head-concat + fc_o fused: accumulate against this head's row slice of Wo
        contrib = jnp.dot(w, wo[lo:lo + head_dim, :], preferred_element_type=jnp.float32)
        out = contrib if out is None else out + contrib

    o_ref[...] = out + bo_ref[...]


# ------------------------------ JAX glue ----------------------------------- #
def relative_embeddings(table, length_q, length_k, max_rel):
    """RelativePosition.forward — used only by the pure-JAX reference."""
    rq = jnp.arange(length_q)
    rk = jnp.arange(length_k)
    dist = rk[None, :] - rq[:, None]
    idx = jnp.clip(dist, -max_rel, max_rel) + max_rel
    return table[idx]                                               # (Lq, Lk, D)


def mha_forward(query, key, value, params):
    b, seq, hid = query.shape
    bl = b * seq

    flat = lambda t: t.reshape(bl, hid)
    # concat query|key|value along lanes -> one lane-dense input slab (BL, 3*HID)
    xcat = jnp.concatenate([flat(query), flat(key), flat(value)], axis=-1)

    # block-diagonal fused projection weight / bias
    z = jnp.zeros((hid, hid), jnp.float32)
    wqkv = jnp.concatenate([
        jnp.concatenate([params['wq'], z, z], axis=1),
        jnp.concatenate([z, params['wk'], z], axis=1),
        jnp.concatenate([z, z, params['wv']], axis=1),
    ], axis=0)                                                              # (3H, 3H)
    bqkv = jnp.concatenate([params['bq'], params['bk'], params['bv']], axis=-1)  # (1, 3H)

    # clipped-distance buckets -> one-hot masks expanded onto the folded (B*L) axis
    r = jnp.arange(seq)
    dist = jnp.clip(r[None, :] - r[:, None], -MAX_REL, MAX_REL) + MAX_REL   # (L, L), in [0, n_rel)
    oh_ll = jax.nn.one_hot(dist, N_REL, dtype=jnp.float32)                  # (L, L, n_rel)
    eye_b = jnp.eye(b, dtype=jnp.float32)
    onehot = jnp.einsum('qkc,uv->cuqvk', oh_ll, eye_b).reshape(N_REL, bl, bl)

    # additive block-diagonal mask: 0 within a batch element, -1e9 across batch elements
    blk = jnp.kron(eye_b, jnp.ones((seq, seq), jnp.float32))                # (BL, BL)
    bmask = jnp.where(blk > 0.5, jnp.float32(0.0), jnp.float32(-1e9))

    rkT = params['rel_k_table'].T                                           # (D, n_rel)
    rv = params['rel_v_table']                                              # (n_rel, D)

    kernel = functools.partial(mha_kernel, n_heads=HEADS, head_dim=HEAD_DIM,
                               hid_dim=hid, n_rel=N_REL)

    # Grid-less call: every operand is a whole-array VMEM block (total footprint < 64 KiB),
    # so there is no per-step overhead and invariant weights are DMA'd exactly once.
    out2d = pl.pallas_call(
        kernel,
        out_shape=jax.ShapeDtypeStruct((bl, hid), jnp.float32),
    )(xcat, wqkv, bqkv, params['wo'], params['bo'], rkT, rv, onehot, bmask)

    return out2d.reshape(b, seq, hid)


# -------------------------- pure-JAX reference ----------------------------- #
def mha_reference(query, key, value, params):
    b, seq, hid = query.shape
    q = query @ params['wq'] + params['bq'][0]
    k = key @ params['wk'] + params['bk'][0]
    v = value @ params['wv'] + params['bv'][0]

    qh = q.reshape(b, seq, HEADS, HEAD_DIM).transpose(0, 2, 1, 3)
    kh = k.reshape(b, seq, HEADS, HEAD_DIM).transpose(0, 2, 1, 3)
    vh = v.reshape(b, seq, HEADS, HEAD_DIM).transpose(0, 2, 1, 3)

    rk2 = relative_embeddings(params['rel_k_table'], seq, seq, MAX_REL)
    rv2 = relative_embeddings(params['rel_v_table'], seq, seq, MAX_REL)

    attn1 = jnp.einsum('bhqd,bhkd->bhqk', qh, kh)
    attn2 = jnp.einsum('bhqd,qkd->bhqk', qh, rk2)
    attn = (attn1 + attn2) / jnp.sqrt(jnp.float32(HEAD_DIM))
    attn = jax.nn.softmax(attn, axis=-1)

    w1 = jnp.einsum('bhqk,bhkd->bhqd', attn, vh)
    w2 = jnp.einsum('bhqk,qkd->bhqd', attn, rv2)
    x = (w1 + w2).transpose(0, 2, 1, 3).reshape(b, seq, hid)
    return x @ params['wo'] + params['bo'][0]


# --------------------------------- main ------------------------------------ #
if __name__ == "__main__":
    root = jax.random.PRNGKey(0)
    ks = jax.random.split(root, 16)

    s = 1.0 / jnp.sqrt(jnp.float32(HID))
    params = {
        'wq': jax.random.normal(ks[0], (HID, HID), jnp.float32) * s,
        'bq': jax.random.normal(ks[1], (1, HID), jnp.float32) * 0.1,
        'wk': jax.random.normal(ks[2], (HID, HID), jnp.float32) * s,
        'bk': jax.random.normal(ks[3], (1, HID), jnp.float32) * 0.1,
        'wv': jax.random.normal(ks[4], (HID, HID), jnp.float32) * s,
        'bv': jax.random.normal(ks[5], (1, HID), jnp.float32) * 0.1,
        'wo': jax.random.normal(ks[6], (HID, HID), jnp.float32) * s,
        'bo': jax.random.normal(ks[7], (1, HID), jnp.float32) * 0.1,
        # RelativePosition embedding tables: (2*max_rel + 1, head_dim)
        'rel_k_table': jax.random.normal(ks[8], (N_REL, HEAD_DIM), jnp.float32) * 0.1,
        'rel_v_table': jax.random.normal(ks[9], (N_REL, HEAD_DIM), jnp.float32) * 0.1,
    }

    query = jax.random.normal(ks[10], (B, L, HID), jnp.float32)
    key = jax.random.normal(ks[11], (B, L, HID), jnp.float32)
    value = jax.random.normal(ks[12], (B, L, HID), jnp.float32)

    out = mha_forward(query, key, value, params)
    out = jax.block_until_ready(out)

    ref = mha_reference(query, key, value, params)
    assert out.shape == (B, L, HID) and out.dtype == jnp.float32
    assert jnp.allclose(out, ref, atol=1e-2, rtol=1e-2), float(jnp.max(jnp.abs(out - ref)))

    print("KERNEL_OK")
</pallas_src>

<mosaic_0001>
module attributes {stable_mosaic.version = 11 : i64} {
  func.func @mha_kernel(%arg0: memref<16x96xf32, #tpu.memory_space<vmem>>, %arg1: memref<96x96xf32, #tpu.memory_space<vmem>>, %arg2: memref<1x96xf32, #tpu.memory_space<vmem>>, %arg3: memref<32x32xf32, #tpu.memory_space<vmem>>, %arg4: memref<1x32xf32, #tpu.memory_space<vmem>>, %arg5: memref<8x5xf32, #tpu.memory_space<vmem>>, %arg6: memref<5x8xf32, #tpu.memory_space<vmem>>, %arg7: memref<5x16x16xf32, #tpu.memory_space<vmem>>, %arg8: memref<16x16xf32, #tpu.memory_space<vmem>>, %arg9: memref<16x32xf32, #tpu.memory_space<vmem>>) attributes {dimension_semantics = [], scalar_prefetch = 0 : i64, scratch_operands = 0 : i64, tpu.core_type = #tpu.core_type<tc>} {
    %c0 = arith.constant 0 : index
    %c0_0 = arith.constant 0 : index
    %0 = vector.load %arg0[%c0, %c0_0] : memref<16x96xf32, #tpu.memory_space<vmem>>, vector<16x96xf32>
    %c0_1 = arith.constant 0 : index
    %c0_2 = arith.constant 0 : index
    %1 = vector.load %arg1[%c0_1, %c0_2] : memref<96x96xf32, #tpu.memory_space<vmem>>, vector<96x96xf32>
    %cst = arith.constant dense<0.000000e+00> : vector<16x96xf32>
    %2 = tpu.matmul %0, %1, %cst {dimension_numbers = #tpu.dot_dimension_numbers<[1], [0], [0], [1], [0, 0, 1, 1], [], []>} : vector<16x96xf32>, vector<96x96xf32>, vector<16x96xf32> -> vector<16x96xf32>
    %c0_3 = arith.constant 0 : index
    %c0_4 = arith.constant 0 : index
    %3 = vector.load %arg2[%c0_3, %c0_4] : memref<1x96xf32, #tpu.memory_space<vmem>>, vector<1x96xf32>
    %4 = vector.broadcast %3 : vector<1x96xf32> to vector<16x96xf32>
    %5 = arith.addf %2, %4 : vector<16x96xf32>
    %6 = vector.extract_strided_slice %5 {offsets = [0, 0], sizes = [16, 32], strides = [1, 1]} : vector<16x96xf32> to vector<16x32xf32>
    %cst_5 = arith.constant 0.353553385 : f32
    %7 = vector.broadcast %cst_5 : f32 to vector<16x32xf32>
    %8 = arith.mulf %6, %7 : vector<16x32xf32>
    %9 = vector.extract_strided_slice %5 {offsets = [0, 32], sizes = [16, 32], strides = [1, 1]} : vector<16x96xf32> to vector<16x32xf32>
    %10 = vector.extract_strided_slice %5 {offsets = [0, 64], sizes = [16, 32], strides = [1, 1]} : vector<16x96xf32> to vector<16x32xf32>
    %c0_6 = arith.constant 0 : index
    %c0_7 = arith.constant 0 : index
    %11 = vector.load %arg8[%c0_6, %c0_7] : memref<16x16xf32, #tpu.memory_space<vmem>>, vector<16x16xf32>
    %c0_8 = arith.constant 0 : index
    %c0_9 = arith.constant 0 : index
    %12 = vector.load %arg5[%c0_8, %c0_9] : memref<8x5xf32, #tpu.memory_space<vmem>>, vector<8x5xf32>
    %c0_10 = arith.constant 0 : index
    %c0_11 = arith.constant 0 : index
    %13 = vector.load %arg6[%c0_10, %c0_11] : memref<5x8xf32, #tpu.memory_space<vmem>>, vector<5x8xf32>
    %c0_12 = arith.constant 0 : index
    %c0_13 = arith.constant 0 : index
    %14 = vector.load %arg3[%c0_12, %c0_13] : memref<32x32xf32, #tpu.memory_space<vmem>>, vector<32x32xf32>
    %c0_14 = arith.constant 0 : index
    %c0_15 = arith.constant 0 : index
    %c0_16 = arith.constant 0 : index
    %15 = vector.load %arg7[%c0_14, %c0_15, %c0_16] : memref<5x16x16xf32, #tpu.memory_space<vmem>>, vector<1x16x16xf32>
    %16 = vector.shape_cast %15 : vector<1x16x16xf32> to vector<16x16xf32>
    %c1 = arith.constant 1 : index
    %c0_17 = arith.constant 0 : index
    %c0_18 = arith.constant 0 : index
    %17 = vector.load %arg7[%c1, %c0_17, %c0_18] : memref<5x16x16xf32, #tpu.memory_space<vmem>>, vector<1x16x16xf32>
    %18 = vector.shape_cast %17 : vector<1x16x16xf32> to vector<16x16xf32>
    %c2 = arith.constant 2 : index
    %c0_19 = arith.constant 0 : index
    %c0_20 = arith.constant 0 : index
    %19 = vector.load %arg7[%c2, %c0_19, %c0_20] : memref<5x16x16xf32, #tpu.memory_space<vmem>>, vector<1x16x16xf32>
    %20 = vector.shape_cast %19 : vector<1x16x16xf32> to vector<16x16xf32>
    %c3 = arith.constant 3 : index
    %c0_21 = arith.constant 0 : index
    %c0_22 = arith.constant 0 : index
    %21 = vector.load %arg7[%c3, %c0_21, %c0_22] : memref<5x16x16xf32, #tpu.memory_space<vmem>>, vector<1x16x16xf32>
    %22 = vector.shape_cast %21 : vector<1x16x16xf32> to vector<16x16xf32>
    %c4 = arith.constant 4 : index
    %c0_23 = arith.constant 0 : index
    %c0_24 = arith.constant 0 : index
    %23 = vector.load %arg7[%c4, %c0_23, %c0_24] : memref<5x16x16xf32, #tpu.memory_space<vmem>>, vector<1x16x16xf32>
    %24 = vector.shape_cast %23 : vector<1x16x16xf32> to vector<16x16xf32>
    %25 = vector.extract_strided_slice %8 {offsets = [0, 0], sizes = [16, 8], strides = [1, 1]} : vector<16x32xf32> to vector<16x8xf32>
    %26 = vector.extract_strided_slice %9 {offsets = [0, 0], sizes = [16, 8], strides = [1, 1]} : vector<16x32xf32> to vector<16x8xf32>
    %27 = vector.extract_strided_slice %10 {offsets = [0, 0], sizes = [16, 8], strides = [1, 1]} : vector<16x32xf32> to vector<16x8xf32>
    "tpu.trace_start"() <{level = 10 : i32, message = "qd,kd->qk"}> : () -> ()
    %cst_25 = arith.constant dense<0.000000e+00> : vector<16x16xf32>
    %28 = tpu.matmul %25, %26, %cst_25 {dimension_numbers = #tpu.dot_dimension_numbers<[1], [1], [0], [0], [0, 0, 1, 0], [], []>} : vector<16x8xf32>, vector<16x8xf32>, vector<16x16xf32> -> vector<16x16xf32>
    "tpu.trace_stop"() : () -> ()
    %cst_26 = arith.constant dense<0.000000e+00> : vector<16x5xf32>
    %29 = tpu.matmul %25, %12, %cst_26 {dimension_numbers = #tpu.dot_dimension_numbers<[1], [0], [0], [1], [0, 0, 1, 1], [], []>} : vector<16x8xf32>, vector<8x5xf32>, vector<16x5xf32> -> vector<16x5xf32>
    %30 = vector.extract_strided_slice %29 {offsets = [0, 0], sizes = [16, 1], strides = [1, 1]} : vector<16x5xf32> to vector<16x1xf32>
    %31 = vector.broadcast %30 : vector<16x1xf32> to vector<16x16xf32>
    %32 = arith.mulf %31, %16 : vector<16x16xf32>
    %33 = arith.addf %28, %32 : vector<16x16xf32>
    %34 = vector.extract_strided_slice %29 {offsets = [0, 1], sizes = [16, 1], strides = [1, 1]} : vector<16x5xf32> to vector<16x1xf32>
    %35 = vector.broadcast %34 : vector<16x1xf32> to vector<16x16xf32>
    %36 = arith.mulf %35, %18 : vector<16x16xf32>
    %37 = arith.addf %33, %36 : vector<16x16xf32>
    %38 = vector.extract_strided_slice %29 {offsets = [0, 2], sizes = [16, 1], strides = [1, 1]} : vector<16x5xf32> to vector<16x1xf32>
    %39 = vector.broadcast %38 : vector<16x1xf32> to vector<16x16xf32>
    %40 = arith.mulf %39, %20 : vector<16x16xf32>
    %41 = arith.addf %37, %40 : vector<16x16xf32>
    %42 = vector.extract_strided_slice %29 {offsets = [0, 3], sizes = [16, 1], strides = [1, 1]} : vector<16x5xf32> to vector<16x1xf32>
    %43 = vector.broadcast %42 : vector<16x1xf32> to vector<16x16xf32>
    %44 = arith.mulf %43, %22 : vector<16x16xf32>
    %45 = arith.addf %41, %44 : vector<16x16xf32>
    %46 = vector.extract_strided_slice %29 {offsets = [0, 4], sizes = [16, 1], strides = [1, 1]} : vector<16x5xf32> to vector<16x1xf32>
    %47 = vector.broadcast %46 : vector<16x1xf32> to vector<16x16xf32>
    %48 = arith.mulf %47, %24 : vector<16x16xf32>
    %49 = arith.addf %45, %48 : vector<16x16xf32>
    %50 = arith.addf %49, %11 : vector<16x16xf32>
    %cst_27 = arith.constant dense<0xFF800000> : vector<16xf32>
    %51 = vector.multi_reduction <maximumf>, %50, %cst_27 [1] : vector<16x16xf32> to vector<16xf32>
    %52 = vector.shape_cast %51 : vector<16xf32> to vector<16x1xf32>
    %53 = vector.broadcast %52 : vector<16x1xf32> to vector<16x16xf32>
    %54 = arith.subf %50, %53 : vector<16x16xf32>
    %55 = math.exp %54 : vector<16x16xf32>
    %cst_28 = arith.constant dense<0.000000e+00> : vector<16xf32>
    %56 = vector.multi_reduction <add>, %55, %cst_28 [1] : vector<16x16xf32> to vector<16xf32>
    %57 = vector.shape_cast %56 : vector<16xf32> to vector<16x1xf32>
    %58 = tpu.reciprocal %57 {approx = true} : vector<16x1xf32> -> vector<16x1xf32>
    %59 = vector.broadcast %58 : vector<16x1xf32> to vector<16x16xf32>
    %60 = arith.mulf %55, %59 : vector<16x16xf32>
    %cst_29 = arith.constant dense<0.000000e+00> : vector<16x8xf32>
    %61 = tpu.matmul %60, %27, %cst_29 {dimension_numbers = #tpu.dot_dimension_numbers<[1], [0], [0], [1], [0, 0, 1, 1], [], []>} : vector<16x16xf32>, vector<16x8xf32>, vector<16x8xf32> -> vector<16x8xf32>
    %62 = arith.mulf %60, %16 : vector<16x16xf32>
    %cst_30 = arith.constant dense<0.000000e+00> : vector<16xf32>
    %63 = vector.multi_reduction <add>, %62, %cst_30 [1] : vector<16x16xf32> to vector<16xf32>
    %64 = vector.shape_cast %63 : vector<16xf32> to vector<16x1xf32>
    %65 = vector.extract_strided_slice %13 {offsets = [0, 0], sizes = [1, 8], strides = [1, 1]} : vector<5x8xf32> to vector<1x8xf32>
    %66 = vector.broadcast %64 : vector<16x1xf32> to vector<16x8xf32>
    %67 = vector.broadcast %65 : vector<1x8xf32> to vector<16x8xf32>
    %68 = arith.mulf %66, %67 : vector<16x8xf32>
    %69 = arith.addf %61, %68 : vector<16x8xf32>
    %70 = arith.mulf %60, %18 : vector<16x16xf32>
    %cst_31 = arith.constant dense<0.000000e+00> : vector<16xf32>
    %71 = vector.multi_reduction <add>, %70, %cst_31 [1] : vector<16x16xf32> to vector<16xf32>
    %72 = vector.shape_cast %71 : vector<16xf32> to vector<16x1xf32>
    %73 = vector.extract_strided_slice %13 {offsets = [1, 0], sizes = [1, 8], strides = [1, 1]} : vector<5x8xf32> to vector<1x8xf32>
    %74 = vector.broadcast %72 : vector<16x1xf32> to vector<16x8xf32>
    %75 = vector.broadcast %73 : vector<1x8xf32> to vector<16x8xf32>
    %76 = arith.mulf %74, %75 : vector<16x8xf32>
    %77 = arith.addf %69, %76 : vector<16x8xf32>
    %78 = arith.mulf %60, %20 : vector<16x16xf32>
    %cst_32 = arith.constant dense<0.000000e+00> : vector<16xf32>
    %79 = vector.multi_reduction <add>, %78, %cst_32 [1] : vector<16x16xf32> to vector<16xf32>
    %80 = vector.shape_cast %79 : vector<16xf32> to vector<16x1xf32>
    %81 = vector.extract_strided_slice %13 {offsets = [2, 0], sizes = [1, 8], strides = [1, 1]} : vector<5x8xf32> to vector<1x8xf32>
    %82 = vector.broadcast %80 : vector<16x1xf32> to vector<16x8xf32>
    %83 = vector.broadcast %81 : vector<1x8xf32> to vector<16x8xf32>
    %84 = arith.mulf %82, %83 : vector<16x8xf32>
    %85 = arith.addf %77, %84 : vector<16x8xf32>
    %86 = arith.mulf %60, %22 : vector<16x16xf32>
    %cst_33 = arith.constant dense<0.000000e+00> : vector<16xf32>
    %87 = vector.multi_reduction <add>, %86, %cst_33 [1] : vector<16x16xf32> to vector<16xf32>
    %88 = vector.shape_cast %87 : vector<16xf32> to vector<16x1xf32>
    %89 = vector.extract_strided_slice %13 {offsets = [3, 0], sizes = [1, 8], strides = [1, 1]} : vector<5x8xf32> to vector<1x8xf32>
    %90 = vector.broadcast %88 : vector<16x1xf32> to vector<16x8xf32>
    %91 = vector.broadcast %89 : vector<1x8xf32> to vector<16x8xf32>
    %92 = arith.mulf %90, %91 : vector<16x8xf32>
    %93 = arith.addf %85, %92 : vector<16x8xf32>
    %94 = arith.mulf %60, %24 : vector<16x16xf32>
    %cst_34 = arith.constant dense<0.000000e+00> : vector<16xf32>
    %95 = vector.multi_reduction <add>, %94, %cst_34 [1] : vector<16x16xf32> to vector<16xf32>
    %96 = vector.shape_cast %95 : vector<16xf32> to vector<16x1xf32>
    %97 = vector.extract_strided_slice %13 {offsets = [4, 0], sizes = [1, 8], strides = [1, 1]} : vector<5x8xf32> to vector<1x8xf32>
    %98 = vector.broadcast %96 : vector<16x1xf32> to vector<16x8xf32>
    %99 = vector.broadcast %97 : vector<1x8xf32> to vector<16x8xf32>
    %100 = arith.mulf %98, %99 : vector<16x8xf32>
    %101 = arith.addf %93, %100 : vector<16x8xf32>
    %102 = vector.extract_strided_slice %14 {offsets = [0, 0], sizes = [8, 32], strides = [1, 1]} : vector<32x32xf32> to vector<8x32xf32>
    %cst_35 = arith.constant dense<0.000000e+00> : vector<16x32xf32>
    %103 = tpu.matmul %101, %102, %cst_35 {dimension_numbers = #tpu.dot_dimension_numbers<[1], [0], [0], [1], [0, 0, 1, 1], [], []>} : vector<16x8xf32>, vector<8x32xf32>, vector<16x32xf32> -> vector<16x32xf32>
    %104 = vector.extract_strided_slice %8 {offsets = [0, 8], sizes = [16, 8], strides = [1, 1]} : vector<16x32xf32> to vector<16x8xf32>
    %105 = vector.extract_strided_slice %9 {offsets = [0, 8], sizes = [16, 8], strides = [1, 1]} : vector<16x32xf32> to vector<16x8xf32>
    %106 = vector.extract_strided_slice %10 {offsets = [0, 8], sizes = [16, 8], strides = [1, 1]} : vector<16x32xf32> to vector<16x8xf32>
    "tpu.trace_start"() <{level = 10 : i32, message = "qd,kd->qk"}> : () -> ()
    %cst_36 = arith.constant dense<0.000000e+00> : vector<16x16xf32>
    %107 = tpu.matmul %104, %105, %cst_36 {dimension_numbers = #tpu.dot_dimension_numbers<[1], [1], [0], [0], [0, 0, 1, 0], [], []>} : vector<16x8xf32>, vector<16x8xf32>, vector<16x16xf32> -> vector<16x16xf32>
    "tpu.trace_stop"() : () -> ()
    %cst_37 = arith.constant dense<0.000000e+00> : vector<16x5xf32>
    %108 = tpu.matmul %104, %12, %cst_37 {dimension_numbers = #tpu.dot_dimension_numbers<[1], [0], [0], [1], [0, 0, 1, 1], [], []>} : vector<16x8xf32>, vector<8x5xf32>, vector<16x5xf32> -> vector<16x5xf32>
    %109 = vector.extract_strided_slice %108 {offsets = [0, 0], sizes = [16, 1], strides = [1, 1]} : vector<16x5xf32> to vector<16x1xf32>
    %110 = vector.broadcast %109 : vector<16x1xf32> to vector<16x16xf32>
    %111 = arith.mulf %110, %16 : vector<16x16xf32>
    %112 = arith.addf %107, %111 : vector<16x16xf32>
    %113 = vector.extract_strided_slice %108 {offsets = [0, 1], sizes = [16, 1], strides = [1, 1]} : vector<16x5xf32> to vector<16x1xf32>
    %114 = vector.broadcast %113 : vector<16x1xf32> to vector<16x16xf32>
    %115 = arith.mulf %114, %18 : vector<16x16xf32>
    %116 = arith.addf %112, %115 : vector<16x16xf32>
    %117 = vector.extract_strided_slice %108 {offsets = [0, 2], sizes = [16, 1], strides = [1, 1]} : vector<16x5xf32> to vector<16x1xf32>
    %118 = vector.broadcast %117 : vector<16x1xf32> to vector<16x16xf32>
    %119 = arith.mulf %118, %20 : vector<16x16xf32>
    %120 = arith.addf %116, %119 : vector<16x16xf32>
    %121 = vector.extract_strided_slice %108 {offsets = [0, 3], sizes = [16, 1], strides = [1, 1]} : vector<16x5xf32> to vector<16x1xf32>
    %122 = vector.broadcast %121 : vector<16x1xf32> to vector<16x16xf32>
    %123 = arith.mulf %122, %22 : vector<16x16xf32>
    %124 = arith.addf %120, %123 : vector<16x16xf32>
    %125 = vector.extract_strided_slice %108 {offsets = [0, 4], sizes = [16, 1], strides = [1, 1]} : vector<16x5xf32> to vector<16x1xf32>
    %126 = vector.broadcast %125 : vector<16x1xf32> to vector<16x16xf32>
    %127 = arith.mulf %126, %24 : vector<16x16xf32>
    %128 = arith.addf %124, %127 : vector<16x16xf32>
    %129 = arith.addf %128, %11 : vector<16x16xf32>
    %cst_38 = arith.constant dense<0xFF800000> : vector<16xf32>
    %130 = vector.multi_reduction <maximumf>, %129, %cst_38 [1] : vector<16x16xf32> to vector<16xf32>
    %131 = vector.shape_cast %130 : vector<16xf32> to vector<16x1xf32>
    %132 = vector.broadcast %131 : vector<16x1xf32> to vector<16x16xf32>
    %133 = arith.subf %129, %132 : vector<16x16xf32>
    %134 = math.exp %133 : vector<16x16xf32>
    %cst_39 = arith.constant dense<0.000000e+00> : vector<16xf32>
    %135 = vector.multi_reduction <add>, %134, %cst_39 [1] : vector<16x16xf32> to vector<16xf32>
    %136 = vector.shape_cast %135 : vector<16xf32> to vector<16x1xf32>
    %137 = tpu.reciprocal %136 {approx = true} : vector<16x1xf32> -> vector<16x1xf32>
    %138 = vector.broadcast %137 : vector<16x1xf32> to vector<16x16xf32>
    %139 = arith.mulf %134, %138 : vector<16x16xf32>
    %cst_40 = arith.constant dense<0.000000e+00> : vector<16x8xf32>
    %140 = tpu.matmul %139, %106, %cst_40 {dimension_numbers = #tpu.dot_dimension_numbers<[1], [0], [0], [1], [0, 0, 1, 1], [], []>} : vector<16x16xf32>, vector<16x8xf32>, vector<16x8xf32> -> vector<16x8xf32>
    %141 = arith.mulf %139, %16 : vector<16x16xf32>
    %cst_41 = arith.constant dense<0.000000e+00> : vector<16xf32>
    %142 = vector.multi_reduction <add>, %141, %cst_41 [1] : vector<16x16xf32> to vector<16xf32>
    %143 = vector.shape_cast %142 : vector<16xf32> to vector<16x1xf32>
    %144 = vector.extract_strided_slice %13 {offsets = [0, 0], sizes = [1, 8], strides = [1, 1]} : vector<5x8xf32> to vector<1x8xf32>
    %145 = vector.broadcast %143 : vector<16x1xf32> to vector<16x8xf32>
    %146 = vector.broadcast %144 : vector<1x8xf32> to vector<16x8xf32>
    %147 = arith.mulf %145, %146 : vector<16x8xf32>
    %148 = arith.addf %140, %147 : vector<16x8xf32>
    %149 = arith.mulf %139, %18 : vector<16x16xf32>
    %cst_42 = arith.constant dense<0.000000e+00> : vector<16xf32>
    %150 = vector.multi_reduction <add>, %149, %cst_42 [1] : vector<16x16xf32> to vector<16xf32>
    %151 = vector.shape_cast %150 : vector<16xf32> to vector<16x1xf32>
    %152 = vector.extract_strided_slice %13 {offsets = [1, 0], sizes = [1, 8], strides = [1, 1]} : vector<5x8xf32> to vector<1x8xf32>
    %153 = vector.broadcast %151 : vector<16x1xf32> to vector<16x8xf32>
    %154 = vector.broadcast %152 : vector<1x8xf32> to vector<16x8xf32>
    %155 = arith.mulf %153, %154 : vector<16x8xf32>
    %156 = arith.addf %148, %155 : vector<16x8xf32>
    %157 = arith.mulf %139, %20 : vector<16x16xf32>
    %cst_43 = arith.constant dense<0.000000e+00> : vector<16xf32>
    %158 = vector.multi_reduction <add>, %157, %cst_43 [1] : vector<16x16xf32> to vector<16xf32>
    %159 = vector.shape_cast %158 : vector<16xf32> to vector<16x1xf32>
    %160 = vector.extract_strided_slice %13 {offsets = [2, 0], sizes = [1, 8], strides = [1, 1]} : vector<5x8xf32> to vector<1x8xf32>
    %161 = vector.broadcast %159 : vector<16x1xf32> to vector<16x8xf32>
    %162 = vector.broadcast %160 : vector<1x8xf32> to vector<16x8xf32>
    %163 = arith.mulf %161, %162 : vector<16x8xf32>
    %164 = arith.addf %156, %163 : vector<16x8xf32>
    %165 = arith.mulf %139, %22 : vector<16x16xf32>
    %cst_44 = arith.constant dense<0.000000e+00> : vector<16xf32>
    %166 = vector.multi_reduction <add>, %165, %cst_44 [1] : vector<16x16xf32> to vector<16xf32>
    %167 = vector.shape_cast %166 : vector<16xf32> to vector<16x1xf32>
    %168 = vector.extract_strided_slice %13 {offsets = [3, 0], sizes = [1, 8], strides = [1, 1]} : vector<5x8xf32> to vector<1x8xf32>
    %169 = vector.broadcast %167 : vector<16x1xf32> to vector<16x8xf32>
    %170 = vector.broadcast %168 : vector<1x8xf32> to vector<16x8xf32>
    %171 = arith.mulf %169, %170 : vector<16x8xf32>
    %172 = arith.addf %164, %171 : vector<16x8xf32>
    %173 = arith.mulf %139, %24 : vector<16x16xf32>
    %cst_45 = arith.constant dense<0.000000e+00> : vector<16xf32>
    %174 = vector.multi_reduction <add>, %173, %cst_45 [1] : vector<16x16xf32> to vector<16xf32>
    %175 = vector.shape_cast %174 : vector<16xf32> to vector<16x1xf32>
    %176 = vector.extract_strided_slice %13 {offsets = [4, 0], sizes = [1, 8], strides = [1, 1]} : vector<5x8xf32> to vector<1x8xf32>
    %177 = vector.broadcast %175 : vector<16x1xf32> to vector<16x8xf32>
    %178 = vector.broadcast %176 : vector<1x8xf32> to vector<16x8xf32>
    %179 = arith.mulf %177, %178 : vector<16x8xf32>
    %180 = arith.addf %172, %179 : vector<16x8xf32>
    %181 = vector.extract_strided_slice %14 {offsets = [8, 0], sizes = [8, 32], strides = [1, 1]} : vector<32x32xf32> to vector<8x32xf32>
    %cst_46 = arith.constant dense<0.000000e+00> : vector<16x32xf32>
    %182 = tpu.matmul %180, %181, %cst_46 {dimension_numbers = #tpu.dot_dimension_numbers<[1], [0], [0], [1], [0, 0, 1, 1], [], []>} : vector<16x8xf32>, vector<8x32xf32>, vector<16x32xf32> -> vector<16x32xf32>
    %183 = arith.addf %103, %182 : vector<16x32xf32>
    %184 = vector.extract_strided_slice %8 {offsets = [0, 16], sizes = [16, 8], strides = [1, 1]} : vector<16x32xf32> to vector<16x8xf32>
    %185 = vector.extract_strided_slice %9 {offsets = [0, 16], sizes = [16, 8], strides = [1, 1]} : vector<16x32xf32> to vector<16x8xf32>
    %186 = vector.extract_strided_slice %10 {offsets = [0, 16], sizes = [16, 8], strides = [1, 1]} : vector<16x32xf32> to vector<16x8xf32>
    "tpu.trace_start"() <{level = 10 : i32, message = "qd,kd->qk"}> : () -> ()
    %cst_47 = arith.constant dense<0.000000e+00> : vector<16x16xf32>
    %187 = tpu.matmul %184, %185, %cst_47 {dimension_numbers = #tpu.dot_dimension_numbers<[1], [1], [0], [0], [0, 0, 1, 0], [], []>} : vector<16x8xf32>, vector<16x8xf32>, vector<16x16xf32> -> vector<16x16xf32>
    "tpu.trace_stop"() : () -> ()
    %cst_48 = arith.constant dense<0.000000e+00> : vector<16x5xf32>
    %188 = tpu.matmul %184, %12, %cst_48 {dimension_numbers = #tpu.dot_dimension_numbers<[1], [0], [0], [1], [0, 0, 1, 1], [], []>} : vector<16x8xf32>, vector<8x5xf32>, vector<16x5xf32> -> vector<16x5xf32>
    %189 = vector.extract_strided_slice %188 {offsets = [0, 0], sizes = [16, 1], strides = [1, 1]} : vector<16x5xf32> to vector<16x1xf32>
    %190 = vector.broadcast %189 : vector<16x1xf32> to vector<16x16xf32>
    %191 = arith.mulf %190, %16 : vector<16x16xf32>
    %192 = arith.addf %187, %191 : vector<16x16xf32>
    %193 = vector.extract_strided_slice %188 {offsets = [0, 1], sizes = [16, 1], strides = [1, 1]} : vector<16x5xf32> to vector<16x1xf32>
    %194 = vector.broadcast %193 : vector<16x1xf32> to vector<16x16xf32>
    %195 = arith.mulf %194, %18 : vector<16x16xf32>
    %196 = arith.addf %192, %195 : vector<16x16xf32>
    %197 = vector.extract_strided_slice %188 {offsets = [0, 2], sizes = [16, 1], strides = [1, 1]} : vector<16x5xf32> to vector<16x1xf32>
    %198 = vector.broadcast %197 : vector<16x1xf32> to vector<16x16xf32>
    %199 = arith.mulf %198, %20 : vector<16x16xf32>
    %200 = arith.addf %196, %199 : vector<16x16xf32>
    %201 = vector.extract_strided_slice %188 {offsets = [0, 3], sizes = [16, 1], strides = [1, 1]} : vector<16x5xf32> to vector<16x1xf32>
    %202 = vector.broadcast %201 : vector<16x1xf32> to vector<16x16xf32>
    %203 = arith.mulf %202, %22 : vector<16x16xf32>
    %204 = arith.addf %200, %203 : vector<16x16xf32>
    %205 = vector.extract_strided_slice %188 {offsets = [0, 4], sizes = [16, 1], strides = [1, 1]} : vector<16x5xf32> to vector<16x1xf32>
    %206 = vector.broadcast %205 : vector<16x1xf32> to vector<16x16xf32>
    %207 = arith.mulf %206, %24 : vector<16x16xf32>
    %208 = arith.addf %204, %207 : vector<16x16xf32>
    %209 = arith.addf %208, %11 : vector<16x16xf32>
    %cst_49 = arith.constant dense<0xFF800000> : vector<16xf32>
    %210 = vector.multi_reduction <maximumf>, %209, %cst_49 [1] : vector<16x16xf32> to vector<16xf32>
    %211 = vector.shape_cast %210 : vector<16xf32> to vector<16x1xf32>
    %212 = vector.broadcast %211 : vector<16x1xf32> to vector<16x16xf32>
    %213 = arith.subf %209, %212 : vector<16x16xf32>
    %214 = math.exp %213 : vector<16x16xf32>
    %cst_50 = arith.constant dense<0.000000e+00> : vector<16xf32>
    %215 = vector.multi_reduction <add>, %214, %cst_50 [1] : vector<16x16xf32> to vector<16xf32>
    %216 = vector.shape_cast %215 : vector<16xf32> to vector<16x1xf32>
    %217 = tpu.reciprocal %216 {approx = true} : vector<16x1xf32> -> vector<16x1xf32>
    %218 = vector.broadcast %217 : vector<16x1xf32> to vector<16x16xf32>
    %219 = arith.mulf %214, %218 : vector<16x16xf32>
    %cst_51 = arith.constant dense<0.000000e+00> : vector<16x8xf32>
    %220 = tpu.matmul %219, %186, %cst_51 {dimension_numbers = #tpu.dot_dimension_numbers<[1], [0], [0], [1], [0, 0, 1, 1], [], []>} : vector<16x16xf32>, vector<16x8xf32>, vector<16x8xf32> -> vector<16x8xf32>
    %221 = arith.mulf %219, %16 : vector<16x16xf32>
    %cst_52 = arith.constant dense<0.000000e+00> : vector<16xf32>
    %222 = vector.multi_reduction <add>, %221, %cst_52 [1] : vector<16x16xf32> to vector<16xf32>
    %223 = vector.shape_cast %222 : vector<16xf32> to vector<16x1xf32>
    %224 = vector.extract_strided_slice %13 {offsets = [0, 0], sizes = [1, 8], strides = [1, 1]} : vector<5x8xf32> to vector<1x8xf32>
    %225 = vector.broadcast %223 : vector<16x1xf32> to vector<16x8xf32>
    %226 = vector.broadcast %224 : vector<1x8xf32> to vector<16x8xf32>
    %227 = arith.mulf %225, %226 : vector<16x8xf32>
    %228 = arith.addf %220, %227 : vector<16x8xf32>
    %229 = arith.mulf %219, %18 : vector<16x16xf32>
    %cst_53 = arith.constant dense<0.000000e+00> : vector<16xf32>
    %230 = vector.multi_reduction <add>, %229, %cst_53 [1] : vector<16x16xf32> to vector<16xf32>
    %231 = vector.shape_cast %230 : vector<16xf32> to vector<16x1xf32>
    %232 = vector.extract_strided_slice %13 {offsets = [1, 0], sizes = [1, 8], strides = [1, 1]} : vector<5x8xf32> to vector<1x8xf32>
    %233 = vector.broadcast %231 : vector<16x1xf32> to vector<16x8xf32>
    %234 = vector.broadcast %232 : vector<1x8xf32> to vector<16x8xf32>
    %235 = arith.mulf %233, %234 : vector<16x8xf32>
    %236 = arith.addf %228, %235 : vector<16x8xf32>
    %237 = arith.mulf %219, %20 : vector<16x16xf32>
    %cst_54 = arith.constant dense<0.000000e+00> : vector<16xf32>
    %238 = vector.multi_reduction <add>, %237, %cst_54 [1] : vector<16x16xf32> to vector<16xf32>
    %239 = vector.shape_cast %238 : vector<16xf32> to vector<16x1xf32>
    %240 = vector.extract_strided_slice %13 {offsets = [2, 0], sizes = [1, 8], strides = [1, 1]} : vector<5x8xf32> to vector<1x8xf32>
    %241 = vector.broadcast %239 : vector<16x1xf32> to vector<16x8xf32>
    %242 = vector.broadcast %240 : vector<1x8xf32> to vector<16x8xf32>
    %243 = arith.mulf %241, %242 : vector<16x8xf32>
    %244 = arith.addf %236, %243 : vector<16x8xf32>
    %245 = arith.mulf %219, %22 : vector<16x16xf32>
    %cst_55 = arith.constant dense<0.000000e+00> : vector<16xf32>
    %246 = vector.multi_reduction <add>, %245, %cst_55 [1] : vector<16x16xf32> to vector<16xf32>
    %247 = vector.shape_cast %246 : vector<16xf32> to vector<16x1xf32>
    %248 = vector.extract_strided_slice %13 {offsets = [3, 0], sizes = [1, 8], strides = [1, 1]} : vector<5x8xf32> to vector<1x8xf32>
    %249 = vector.broadcast %247 : vector<16x1xf32> to vector<16x8xf32>
    %250 = vector.broadcast %248 : vector<1x8xf32> to vector<16x8xf32>
    %251 = arith.mulf %249, %250 : vector<16x8xf32>
    %252 = arith.addf %244, %251 : vector<16x8xf32>
    %253 = arith.mulf %219, %24 : vector<16x16xf32>
    %cst_56 = arith.constant dense<0.000000e+00> : vector<16xf32>
    %254 = vector.multi_reduction <add>, %253, %cst_56 [1] : vector<16x16xf32> to vector<16xf32>
    %255 = vector.shape_cast %254 : vector<16xf32> to vector<16x1xf32>
    %256 = vector.extract_strided_slice %13 {offsets = [4, 0], sizes = [1, 8], strides = [1, 1]} : vector<5x8xf32> to vector<1x8xf32>
    %257 = vector.broadcast %255 : vector<16x1xf32> to vector<16x8xf32>
    %258 = vector.broadcast %256 : vector<1x8xf32> to vector<16x8xf32>
    %259 = arith.mulf %257, %258 : vector<16x8xf32>
    %260 = arith.addf %252, %259 : vector<16x8xf32>
    %261 = vector.extract_strided_slice %14 {offsets = [16, 0], sizes = [8, 32], strides = [1, 1]} : vector<32x32xf32> to vector<8x32xf32>
    %cst_57 = arith.constant dense<0.000000e+00> : vector<16x32xf32>
    %262 = tpu.matmul %260, %261, %cst_57 {dimension_numbers = #tpu.dot_dimension_numbers<[1], [0], [0], [1], [0, 0, 1, 1], [], []>} : vector<16x8xf32>, vector<8x32xf32>, vector<16x32xf32> -> vector<16x32xf32>
    %263 = arith.addf %183, %262 : vector<16x32xf32>
    %264 = vector.extract_strided_slice %8 {offsets = [0, 24], sizes = [16, 8], strides = [1, 1]} : vector<16x32xf32> to vector<16x8xf32>
    %265 = vector.extract_strided_slice %9 {offsets = [0, 24], sizes = [16, 8], strides = [1, 1]} : vector<16x32xf32> to vector<16x8xf32>
    %266 = vector.extract_strided_slice %10 {offsets = [0, 24], sizes = [16, 8], strides = [1, 1]} : vector<16x32xf32> to vector<16x8xf32>
    "tpu.trace_start"() <{level = 10 : i32, message = "qd,kd->qk"}> : () -> ()
    %cst_58 = arith.constant dense<0.000000e+00> : vector<16x16xf32>
    %267 = tpu.matmul %264, %265, %cst_58 {dimension_numbers = #tpu.dot_dimension_numbers<[1], [1], [0], [0], [0, 0, 1, 0], [], []>} : vector<16x8xf32>, vector<16x8xf32>, vector<16x16xf32> -> vector<16x16xf32>
    "tpu.trace_stop"() : () -> ()
    %cst_59 = arith.constant dense<0.000000e+00> : vector<16x5xf32>
    %268 = tpu.matmul %264, %12, %cst_59 {dimension_numbers = #tpu.dot_dimension_numbers<[1], [0], [0], [1], [0, 0, 1, 1], [], []>} : vector<16x8xf32>, vector<8x5xf32>, vector<16x5xf32> -> vector<16x5xf32>
    %269 = vector.extract_strided_slice %268 {offsets = [0, 0], sizes = [16, 1], strides = [1, 1]} : vector<16x5xf32> to vector<16x1xf32>
    %270 = vector.broadcast %269 : vector<16x1xf32> to vector<16x16xf32>
    %271 = arith.mulf %270, %16 : vector<16x16xf32>
    %272 = arith.addf %267, %271 : vector<16x16xf32>
    %273 = vector.extract_strided_slice %268 {offsets = [0, 1], sizes = [16, 1], strides = [1, 1]} : vector<16x5xf32> to vector<16x1xf32>
    %274 = vector.broadcast %273 : vector<16x1xf32> to vector<16x16xf32>
    %275 = arith.mulf %274, %18 : vector<16x16xf32>
    %276 = arith.addf %272, %275 : vector<16x16xf32>
    %277 = vector.extract_strided_slice %268 {offsets = [0, 2], sizes = [16, 1], strides = [1, 1]} : vector<16x5xf32> to vector<16x1xf32>
    %278 = vector.broadcast %277 : vector<16x1xf32> to vector<16x16xf32>
    %279 = arith.mulf %278, %20 : vector<16x16xf32>
    %280 = arith.addf %276, %279 : vector<16x16xf32>
    %281 = vector.extract_strided_slice %268 {offsets = [0, 3], sizes = [16, 1], strides = [1, 1]} : vector<16x5xf32> to vector<16x1xf32>
    %282 = vector.broadcast %281 : vector<16x1xf32> to vector<16x16xf32>
    %283 = arith.mulf %282, %22 : vector<16x16xf32>
    %284 = arith.addf %280, %283 : vector<16x16xf32>
    %285 = vector.extract_strided_slice %268 {offsets = [0, 4], sizes = [16, 1], strides = [1, 1]} : vector<16x5xf32> to vector<16x1xf32>
    %286 = vector.broadcast %285 : vector<16x1xf32> to vector<16x16xf32>
    %287 = arith.mulf %286, %24 : vector<16x16xf32>
    %288 = arith.addf %284, %287 : vector<16x16xf32>
    %289 = arith.addf %288, %11 : vector<16x16xf32>
    %cst_60 = arith.constant dense<0xFF800000> : vector<16xf32>
    %290 = vector.multi_reduction <maximumf>, %289, %cst_60 [1] : vector<16x16xf32> to vector<16xf32>
    %291 = vector.shape_cast %290 : vector<16xf32> to vector<16x1xf32>
    %292 = vector.broadcast %291 : vector<16x1xf32> to vector<16x16xf32>
    %293 = arith.subf %289, %292 : vector<16x16xf32>
    %294 = math.exp %293 : vector<16x16xf32>
    %cst_61 = arith.constant dense<0.000000e+00> : vector<16xf32>
    %295 = vector.multi_reduction <add>, %294, %cst_61 [1] : vector<16x16xf32> to vector<16xf32>
    %296 = vector.shape_cast %295 : vector<16xf32> to vector<16x1xf32>
    %297 = tpu.reciprocal %296 {approx = true} : vector<16x1xf32> -> vector<16x1xf32>
    %298 = vector.broadcast %297 : vector<16x1xf32> to vector<16x16xf32>
    %299 = arith.mulf %294, %298 : vector<16x16xf32>
    %cst_62 = arith.constant dense<0.000000e+00> : vector<16x8xf32>
    %300 = tpu.matmul %299, %266, %cst_62 {dimension_numbers = #tpu.dot_dimension_numbers<[1], [0], [0], [1], [0, 0, 1, 1], [], []>} : vector<16x16xf32>, vector<16x8xf32>, vector<16x8xf32> -> vector<16x8xf32>
    %301 = arith.mulf %299, %16 : vector<16x16xf32>
    %cst_63 = arith.constant dense<0.000000e+00> : vector<16xf32>
    %302 = vector.multi_reduction <add>, %301, %cst_63 [1] : vector<16x16xf32> to vector<16xf32>
    %303 = vector.shape_cast %302 : vector<16xf32> to vector<16x1xf32>
    %304 = vector.extract_strided_slice %13 {offsets = [0, 0], sizes = [1, 8], strides = [1, 1]} : vector<5x8xf32> to vector<1x8xf32>
    %305 = vector.broadcast %303 : vector<16x1xf32> to vector<16x8xf32>
    %306 = vector.broadcast %304 : vector<1x8xf32> to vector<16x8xf32>
    %307 = arith.mulf %305, %306 : vector<16x8xf32>
    %308 = arith.addf %300, %307 : vector<16x8xf32>
    %309 = arith.mulf %299, %18 : vector<16x16xf32>
    %cst_64 = arith.constant dense<0.000000e+00> : vector<16xf32>
    %310 = vector.multi_reduction <add>, %309, %cst_64 [1] : vector<16x16xf32> to vector<16xf32>
    %311 = vector.shape_cast %310 : vector<16xf32> to vector<16x1xf32>
    %312 = vector.extract_strided_slice %13 {offsets = [1, 0], sizes = [1, 8], strides = [1, 1]} : vector<5x8xf32> to vector<1x8xf32>
    %313 = vector.broadcast %311 : vector<16x1xf32> to vector<16x8xf32>
    %314 = vector.broadcast %312 : vector<1x8xf32> to vector<16x8xf32>
    %315 = arith.mulf %313, %314 : vector<16x8xf32>
    %316 = arith.addf %308, %315 : vector<16x8xf32>
    %317 = arith.mulf %299, %20 : vector<16x16xf32>
    %cst_65 = arith.constant dense<0.000000e+00> : vector<16xf32>
    %318 = vector.multi_reduction <add>, %317, %cst_65 [1] : vector<16x16xf32> to vector<16xf32>
    %319 = vector.shape_cast %318 : vector<16xf32> to vector<16x1xf32>
    %320 = vector.extract_strided_slice %13 {offsets = [2, 0], sizes = [1, 8], strides = [1, 1]} : vector<5x8xf32> to vector<1x8xf32>
    %321 = vector.broadcast %319 : vector<16x1xf32> to vector<16x8xf32>
    %322 = vector.broadcast %320 : vector<1x8xf32> to vector<16x8xf32>
    %323 = arith.mulf %321, %322 : vector<16x8xf32>
    %324 = arith.addf %316, %323 : vector<16x8xf32>
    %325 = arith.mulf %299, %22 : vector<16x16xf32>
    %cst_66 = arith.constant dense<0.000000e+00> : vector<16xf32>
    %326 = vector.multi_reduction <add>, %325, %cst_66 [1] : vector<16x16xf32> to vector<16xf32>
    %327 = vector.shape_cast %326 : vector<16xf32> to vector<16x1xf32>
    %328 = vector.extract_strided_slice %13 {offsets = [3, 0], sizes = [1, 8], strides = [1, 1]} : vector<5x8xf32> to vector<1x8xf32>
    %329 = vector.broadcast %327 : vector<16x1xf32> to vector<16x8xf32>
    %330 = vector.broadcast %328 : vector<1x8xf32> to vector<16x8xf32>
    %331 = arith.mulf %329, %330 : vector<16x8xf32>
    %332 = arith.addf %324, %331 : vector<16x8xf32>
    %333 = arith.mulf %299, %24 : vector<16x16xf32>
    %cst_67 = arith.constant dense<0.000000e+00> : vector<16xf32>
    %334 = vector.multi_reduction <add>, %333, %cst_67 [1] : vector<16x16xf32> to vector<16xf32>
    %335 = vector.shape_cast %334 : vector<16xf32> to vector<16x1xf32>
    %336 = vector.extract_strided_slice %13 {offsets = [4, 0], sizes = [1, 8], strides = [1, 1]} : vector<5x8xf32> to vector<1x8xf32>
    %337 = vector.broadcast %335 : vector<16x1xf32> to vector<16x8xf32>
    %338 = vector.broadcast %336 : vector<1x8xf32> to vector<16x8xf32>
    %339 = arith.mulf %337, %338 : vector<16x8xf32>
    %340 = arith.addf %332, %339 : vector<16x8xf32>
    %341 = vector.extract_strided_slice %14 {offsets = [24, 0], sizes = [8, 32], strides = [1, 1]} : vector<32x32xf32> to vector<8x32xf32>
    %cst_68 = arith.constant dense<0.000000e+00> : vector<16x32xf32>
    %342 = tpu.matmul %340, %341, %cst_68 {dimension_numbers = #tpu.dot_dimension_numbers<[1], [0], [0], [1], [0, 0, 1, 1], [], []>} : vector<16x8xf32>, vector<8x32xf32>, vector<16x32xf32> -> vector<16x32xf32>
    %343 = arith.addf %263, %342 : vector<16x32xf32>
    %c0_69 = arith.constant 0 : index
    %c0_70 = arith.constant 0 : index
    %344 = vector.load %arg4[%c0_69, %c0_70] : memref<1x32xf32, #tpu.memory_space<vmem>>, vector<1x32xf32>
    %345 = vector.broadcast %344 : vector<1x32xf32> to vector<16x32xf32>
    %346 = arith.addf %343, %345 : vector<16x32xf32>
    %c0_71 = arith.constant 0 : index
    %c0_72 = arith.constant 0 : index
    %347 = vector.load %arg9[%c0_71, %c0_72] : memref<16x32xf32, #tpu.memory_space<vmem>>, vector<16x32xf32>
    tpu.vector_store %arg9[%c0_71, %c0_72], %346 {strides = array<i32>} : memref<16x32xf32, #tpu.memory_space<vmem>>, vector<16x32xf32>,
    return
  }
}

</mosaic_0001>

<llo_original>
// kernel: tpu_custom_call.1
$region0: #{tpu_custom_call.1}
  #allocation0 [shape = 'u32[]', space=smem, size = 0x4, offset = 0x4, fixed_abs, tag = 'smem constant byte address 0x4 - core index']
  #allocation1 [shape = 'u32[72,128]{1,0:T(1,128)}', space=vmem, size = 0x9000, scoped, tag = 'internal scratch']
  %s0 = inlined_call_operand.hbm [shape: f32[16,96], index: 0, kind: input, shape index: {}]
  %s1 = inlined_call_operand.hbm [shape: f32[96,96], index: 1, kind: input, shape index: {}]
  %s2 = inlined_call_operand.vmem [shape: f32[1,96], index: 2, kind: input, shape index: {}]
  %s3 = inlined_call_operand.hbm [shape: f32[32,32], index: 3, kind: input, shape index: {}]
  %s4 = inlined_call_operand.vmem [shape: f32[1,32], index: 4, kind: input, shape index: {}]
  %s5 = inlined_call_operand.hbm [shape: f32[8,5], index: 5, kind: input, shape index: {}]
  %s6 = inlined_call_operand.hbm [shape: f32[5,8], index: 6, kind: input, shape index: {}]
  %s7 = inlined_call_operand.hbm [shape: f32[5,16,16], index: 7, kind: input, shape index: {}]
  %s8 = inlined_call_operand.hbm [shape: f32[16,16], index: 8, kind: input, shape index: {}]
  %s9 = inlined_call_operand.hbm [shape: f32[16,32], index: 9, kind: output, shape index: {}]
  %s10 = sld [smem:[#allocation0]]
  $region74: #{tpu_custom_call.1} parent=0
    _
  %s12 = ssub.s32 1, %s10
  %s13 = scalar_select 0, %s12, %s10
  $region1: #{tpu_custom_call.1} parent=0
    #allocation2 [shape = 'u8[8192]{0}', space=vmem, size = 0x2000, scoped, tag = 'input window, operand 0, single buffered']
    #allocation3 [shape = 's32[1]{0}', space=sflag, size = 0x4, scoped, tag = 'scoped memory for tpu_custom_call.1']
    #allocation4 [shape = 's32[1]{0}', space=sflag, size = 0x4, scoped, tag = 'scoped memory for tpu_custom_call.1']
    #allocation5 [shape = 'u8[49152]{0}', space=vmem, size = 0xc000, scoped, tag = 'input window, operand 1, single buffered']
    #allocation6 [shape = 's32[1]{0}', space=sflag, size = 0x4, scoped, tag = 'scoped memory for tpu_custom_call.1']
    #allocation7 [shape = 'u8[16384]{0}', space=vmem, size = 0x4000, scoped, tag = 'input window, operand 3, single buffered']
    #allocation8 [shape = 'u8[4096]{0}', space=vmem, size = 0x1000, scoped, tag = 'input window, operand 5, single buffered']
    #allocation9 [shape = 's32[1]{0}', space=sflag, size = 0x4, scoped, tag = 'scoped memory for tpu_custom_call.1']
    #allocation10 [shape = 'u8[4096]{0}', space=vmem, size = 0x1000, scoped, tag = 'input window, operand 6, single buffered']
    #allocation11 [shape = 'u8[40960]{0}', space=vmem, size = 0xa000, scoped, tag = 'input window, operand 7, single buffered']
    #allocation12 [shape = 's32[1]{0}', space=sflag, size = 0x4, scoped, tag = 'scoped memory for tpu_custom_call.1']
    #allocation13 [shape = 'u8[8192]{0}', space=vmem, size = 0x2000, scoped, tag = 'input window, operand 8, single buffered']
    #allocation14 [shape = 'u8[8192]{0}', space=vmem, size = 0x2000, scoped, tag = 'output window, operand 0, single buffered']
    %14 = vsyncpa [#allocation3], 0
    %15 = vsyncpa [#allocation6], 0
    %16 = vsyncpa [#allocation9], 0
    %17 = vsyncpa [#allocation12], 0
    %18 = vsyncpa [#allocation4], 0
    // Predicated region
    $region2: #{tpu_custom_call.1} parent=1 // pred_check
      _
    $region3: #{tpu_custom_call.1} parent=1 // pred_check_branch
      %20 = sbr.rel (0) target = $region5
    $region4: #{tpu_custom_call.1} parent=1 // pred_region
      %22 = vsyncadd [#allocation3], 0
      %s23 = sshll.u32 %s0, 4
      %s24 = int_to_ptr.hbm [resolvable:$true] %s23
      %s25 = sshll.u32 [#allocation2], 4
      %s26 = int_to_ptr.vmem [resolvable:$true] %s25
      %31 = dma.hbm_to_vmem [thread:$0]  %s24, 256, %s26, [#allocation3], 128, 128, 8
    $region5: #{tpu_custom_call.1} parent=1 // pred_fallthru
      _
    // Predicated region
    $region6: #{tpu_custom_call.1} parent=1 // pred_check
      _
    $region7: #{tpu_custom_call.1} parent=1 // pred_check_branch
      %33 = sbr.rel (0) target = $region9
    $region8: #{tpu_custom_call.1} parent=1 // pred_region
      %35 = vsyncadd [#allocation6], 0
      %s36 = sshll.u32 %s1, 4
      %s37 = int_to_ptr.hbm [resolvable:$true] %s36
      %s38 = sshll.u32 [#allocation5], 4
      %s39 = int_to_ptr.vmem [resolvable:$true] %s38
      %44 = dma.hbm_to_vmem [thread:$0]  %s37, 1536, %s39, [#allocation6], 128, 128, 8
    $region9: #{tpu_custom_call.1} parent=1 // pred_fallthru
      _
    // Predicated region
    $region10: #{tpu_custom_call.1} parent=1 // pred_check
      _
    $region11: #{tpu_custom_call.1} parent=1 // pred_check_branch
      %46 = sbr.rel (0) target = $region13
    $region12: #{tpu_custom_call.1} parent=1 // pred_region
      _
    $region13: #{tpu_custom_call.1} parent=1 // pred_fallthru
      _
    // Predicated region
    $region14: #{tpu_custom_call.1} parent=1 // pred_check
      _
    $region15: #{tpu_custom_call.1} parent=1 // pred_check_branch
      %48 = sbr.rel (0) target = $region17
    $region16: #{tpu_custom_call.1} parent=1 // pred_region
      %50 = vsyncadd [#allocation6], 0
      %s51 = sshll.u32 %s3, 4
      %s52 = int_to_ptr.hbm [resolvable:$true] %s51
      %s53 = sshll.u32 [#allocation7], 4
      %s54 = int_to_ptr.vmem [resolvable:$true] %s53
      %59 = dma.hbm_to_vmem [thread:$0]  %s52, 512, %s54, [#allocation6], 128, 128, 8
    $region17: #{tpu_custom_call.1} parent=1 // pred_fallthru
      _
    // Predicated region
    $region18: #{tpu_custom_call.1} parent=1 // pred_check
      _
    $region19: #{tpu_custom_call.1} parent=1 // pred_check_branch
      %61 = sbr.rel (0) target = $region21
    $region20: #{tpu_custom_call.1} parent=1 // pred_region
      _
    $region21: #{tpu_custom_call.1} parent=1 // pred_fallthru
      _
    // Predicated region
    $region22: #{tpu_custom_call.1} parent=1 // pred_check
      _
    $region23: #{tpu_custom_call.1} parent=1 // pred_check_branch
      %63 = sbr.rel (0) target = $region25
    $region24: #{tpu_custom_call.1} parent=1 // pred_region
      %65 = vsyncadd [#allocation9], 0
      %s67 = sshll.u32 %s5, 4
      %s68 = int_to_ptr.hbm [resolvable:$true] %s67
      %s69 = sshll.u32 [#allocation8], 4
      %s70 = int_to_ptr.vmem [resolvable:$true] %s69
      %72 = dma.hbm_to_vmem [thread:$0]  %s68, 128, %s70, [#allocation9]
    $region25: #{tpu_custom_call.1} parent=1 // pred_fallthru
      _
    // Predicated region
    $region26: #{tpu_custom_call.1} parent=1 // pred_check
      _
    $region27: #{tpu_custom_call.1} parent=1 // pred_check_branch
      %74 = sbr.rel (0) target = $region29
    $region28: #{tpu_custom_call.1} parent=1 // pred_region
      %76 = vsyncadd [#allocation9], 0
      %s78 = sshll.u32 %s6, 4
      %s79 = int_to_ptr.hbm [resolvable:$true] %s78
      %s80 = sshll.u32 [#allocation10], 4
      %s81 = int_to_ptr.vmem [resolvable:$true] %s80
      %83 = dma.hbm_to_vmem [thread:$0]  %s79, 128, %s81, [#allocation9]
    $region29: #{tpu_custom_call.1} parent=1 // pred_fallthru
      _
    // Predicated region
    $region30: #{tpu_custom_call.1} parent=1 // pred_check
      _
    $region31: #{tpu_custom_call.1} parent=1 // pred_check_branch
      %85 = sbr.rel (0) target = $region33
    $region32: #{tpu_custom_call.1} parent=1 // pred_region
      %87 = vsyncadd [#allocation12], 0
      %s88 = sshll.u32 %s7, 4
      %s89 = int_to_ptr.hbm [resolvable:$true] %s88
      %s90 = sshll.u32 [#allocation11], 4
      %s91 = int_to_ptr.vmem [resolvable:$true] %s90
      %96 = dma.hbm_to_vmem [thread:$0]  %s89, 1280, %s91, [#allocation12], 128, 128, 8
    $region33: #{tpu_custom_call.1} parent=1 // pred_fallthru
      _
    // Predicated region
    $region34: #{tpu_custom_call.1} parent=1 // pred_check
      _
    $region35: #{tpu_custom_call.1} parent=1 // pred_check_branch
      %98 = sbr.rel (0) target = $region37
    $region36: #{tpu_custom_call.1} parent=1 // pred_region
      %100 = vsyncadd [#allocation12], 0
      %s101 = sshll.u32 %s8, 4
      %s102 = int_to_ptr.hbm [resolvable:$true] %s101
      %s103 = sshll.u32 [#allocation13], 4
      %s104 = int_to_ptr.vmem [resolvable:$true] %s103
      %109 = dma.hbm_to_vmem [thread:$0]  %s102, 256, %s104, [#allocation12], 128, 128, 8
    $region37: #{tpu_custom_call.1} parent=1 // pred_fallthru
      _
    // Predicated region
    $region38: #{tpu_custom_call.1} parent=1 // pred_check
      _
    $region39: #{tpu_custom_call.1} parent=1 // pred_check_branch
      %111 = sbr.rel (0) target = $region41
    $region40: #{tpu_custom_call.1} parent=1 // pred_region
      %113 = dma.done [#allocation3], 256
    $region41: #{tpu_custom_call.1} parent=1 // pred_fallthru
      _
    // Predicated region
    $region42: #{tpu_custom_call.1} parent=1 // pred_check
      _
    $region43: #{tpu_custom_call.1} parent=1 // pred_check_branch
      %115 = sbr.rel (0) target = $region45
    $region44: #{tpu_custom_call.1} parent=1 // pred_region
      %117 = dma.done [#allocation6], 1536
    $region45: #{tpu_custom_call.1} parent=1 // pred_fallthru
      _
    // Predicated region
    $region46: #{tpu_custom_call.1} parent=1 // pred_check
      _
    $region47: #{tpu_custom_call.1} parent=1 // pred_check_branch
      %119 = sbr.rel (0) target = $region49
    $region48: #{tpu_custom_call.1} parent=1 // pred_region
      %121 = dma.done [#allocation6], 512
    $region49: #{tpu_custom_call.1} parent=1 // pred_fallthru
      _
    // Predicated region
    $region50: #{tpu_custom_call.1} parent=1 // pred_check
      _
    $region51: #{tpu_custom_call.1} parent=1 // pred_check_branch
      %123 = sbr.rel (0) target = $region53
    $region52: #{tpu_custom_call.1} parent=1 // pred_region
      %125 = dma.done [#allocation9], 128
    $region53: #{tpu_custom_call.1} parent=1 // pred_fallthru
      _
    // Predicated region
    $region54: #{tpu_custom_call.1} parent=1 // pred_check
      _
    $region55: #{tpu_custom_call.1} parent=1 // pred_check_branch
      %127 = sbr.rel (0) target = $region57
    $region56: #{tpu_custom_call.1} parent=1 // pred_region
      %129 = dma.done [#allocation9], 128
    $region57: #{tpu_custom_call.1} parent=1 // pred_fallthru
      _
    // Predicated region
    $region58: #{tpu_custom_call.1} parent=1 // pred_check
      _
    $region59: #{tpu_custom_call.1} parent=1 // pred_check_branch
      %131 = sbr.rel (0) target = $region61
    $region60: #{tpu_custom_call.1} parent=1 // pred_region
      %133 = dma.done [#allocation12], 1280
    $region61: #{tpu_custom_call.1} parent=1 // pred_fallthru
      _
    // Predicated region
    $region62: #{tpu_custom_call.1} parent=1 // pred_check
      _
    $region63: #{tpu_custom_call.1} parent=1 // pred_check_branch
      %135 = sbr.rel (0) target = $region65
    $region64: #{tpu_custom_call.1} parent=1 // pred_region
      %137 = dma.done [#allocation12], 256
    $region65: #{tpu_custom_call.1} parent=1 // pred_fallthru
      _
    %v138 = vld [vmem:[#allocation2] sm:$0xff]
    %v139 = vld [vmem:[#allocation2 + $0x8] sm:$0xff]
    %v140 = vld [vmem:[#allocation5] sm:$0xff]
    %v141 = vld [vmem:[#allocation5 + $0x8] sm:$0xff]
    %v142 = vld [vmem:[#allocation5 + $0x10] sm:$0xff]
    %v143 = vld [vmem:[#allocation5 + $0x18] sm:$0xff]
    %v144 = vld [vmem:[#allocation5 + $0x20] sm:$0xff]
    %v145 = vld [vmem:[#allocation5 + $0x28] sm:$0xff]
    %v146 = vld [vmem:[#allocation5 + $0x30] sm:$0xff]
    %v147 = vld [vmem:[#allocation5 + $0x38] sm:$0xff]
    %v148 = vld [vmem:[#allocation5 + $0x40] sm:$0xff]
    %v149 = vld [vmem:[#allocation5 + $0x48] sm:$0xff]
    %v150 = vld [vmem:[#allocation5 + $0x50] sm:$0xff]
    %v151 = vld [vmem:[#allocation5 + $0x58] sm:$0xff]
    %v152 = vld [vmem:[%s2] sm:$0x1]
    %v154 = vperm.slane %v152, 0
    %vm156 = vcmask 785408
    %v158 = vsel %vm156, %v138, 0
    %v161 = vsel %vm156, %v139, 0
    %163 = vmatpush.msra.mxu0 0.0
    %164 = vmatpush.msra.mxu0 0.0
    %165 = vmatpush.msra.mxu0 0.0
    %166 = vmatpush.msra.mxu0 0.0
    %167 = vmatpush.msra.mxu0 %v151
    %168 = vmatpush.msra.mxu0 %v150
    %169 = vmatpush.msra.mxu0 %v149
    %170 = vmatpush.msra.mxu0 %v148
    %171 = vmatpush.msra.mxu0 %v147
    %172 = vmatpush.msra.mxu0 %v146
    %173 = vmatpush.msra.mxu0 %v145
    %174 = vmatpush.msra.mxu0 %v144
    %175 = vmatpush.msra.mxu0 %v143
    %176 = vmatpush.msra.mxu0 %v142
    %177 = vmatpush.msra.mxu0 %v141
    %178 = vmatpush.msra.mxu0 %v140
    %179 = vmatmul.f32.gmra.mxu0 %v158
    %v180 = vpop.f32.mrf.mxu0
    %v181 = vadd.f32 %v154, %v180
    %182 = vmatmul.f32.gmra.mxu0 %v161
    %v183 = vpop.f32.mrf.mxu0
    %v184 = vadd.f32 %v154, %v183
    %185 = vdwg.mxu0
    %v186 = vmul.f32 %v181, 0.35355338
    %v187 = vmul.f32 %v184, 0.35355338
    %v188 = vld [vmem:[#allocation13] sm:$0xff]
    %v189 = vld [vmem:[#allocation13 + $0x8] sm:$0xff]
    %v190 = vld [vmem:[#allocation8] sm:$0xff]
    %v191 = vld [vmem:[#allocation10] sm:$0x1f]
    %v192 = vld [vmem:[#allocation7] sm:$0xff]
    %v193 = vld [vmem:[#allocation7 + $0x8] sm:$0xff]
    %v194 = vld [vmem:[#allocation7 + $0x10] sm:$0xff]
    %v195 = vld [vmem:[#allocation7 + $0x18] sm:$0xff]
    %v196 = vld [vmem:[#allocation11] sm:$0xff]
    %v197 = vld [vmem:[#allocation11 + $0x8] sm:$0xff]
    %s198 = scalar_lea.vmem [#allocation11], 16
    %v199 = vld [vmem:[%s198] sm:$0xff]
    %v200 = vld [vmem:[%s198 + $0x8] sm:$0xff]
    %s201 = scalar_lea.vmem [#allocation11], 32
    %v202 = vld [vmem:[%s201] sm:$0xff]
    %v203 = vld [vmem:[%s201 + $0x8] sm:$0xff]
    %s204 = scalar_lea.vmem [#allocation11], 48
    %v205 = vld [vmem:[%s204] sm:$0xff]
    %v206 = vld [vmem:[%s204 + $0x8] sm:$0xff]
    %s207 = scalar_lea.vmem [#allocation11], 64
    %v208 = vld [vmem:[%s207] sm:$0xff]
    %v209 = vld [vmem:[%s207 + $0x8] sm:$0xff]
    %vm210 = vcmask 64512
    %v212 = vsel %vm210, %v186, 0
    %v215 = vsel %vm210, %v187, 0
    %217 = vmatpush.msra.mxu0 0.0
    %218 = vmatpush.msra.mxu0 0.0
    %219 = vmatpush.msra.mxu0 0.0
    %220 = vmatpush.msra.mxu0 0.0
    %221 = vmatpush.msra.mxu0 0.0
    %222 = vmatpush.msra.mxu0 0.0
    %223 = vmatpush.msra.mxu0 0.0
    %224 = vmatpush.msra.mxu0 0.0
    %225 = vmatpush.msra.mxu0 0.0
    %226 = vmatpush.msra.mxu0 0.0
    %227 = vmatpush.msra.mxu0 0.0
    %228 = vmatpush.msra.mxu0 0.0
    %229 = vmatpush.msra.mxu0 0.0
    %230 = vmatpush.msra.mxu0 0.0
    %231 = vmatpush.msra.mxu0 0.0
    %232 = vmatpush.msra.mxu0 %v190
    %233 = vmatmul.f32.gmra.mxu0 %v212
    %v234 = vpop.f32.mrf.mxu0
    %v235 = vadd.f32 0.0, %v234
    %236 = vmatmul.f32.gmra.mxu0 %v215
    %v237 = vpop.f32.mrf.mxu0
    %v238 = vadd.f32 0.0, %v237
    %239 = vdwg.mxu0
    %241 = vset.pattern.permute.xlu0 0
    %242 = vperm.xlu0 %241, %v235
    %v243 = vpop.permute.xlu0 %242
    %246 = vset.pattern.permute.xlu0 0
    %247 = vperm.xlu0 %246, %v238
    %v248 = vpop.permute.xlu0 %247
    %v250 = vmul.f32 %v243, %v196
    %v251 = vmul.f32 %v248, %v197
    %254 = vrot.lane.b32.xlu0 %v181, 96
    %v255 = vpop.permute.xlu0 %254
    %256 = vrot.lane.b32.xlu0 %v184, 96
    %v257 = vpop.permute.xlu0 %256
    %v258 = vsel %vm210, %v255, 0
    %v260 = vsel %vm210, %v257, 0
    %262 = vmatpush.xpose.msra.mxu0 0.0
    %263 = vmatpush.xpose.msra.mxu0 0.0
    %264 = vmatpush.xpose.msra.mxu0 0.0
    %265 = vmatpush.xpose.msra.mxu0 0.0
    %266 = vmatpush.xpose.msra.mxu0 0.0
    %267 = vmatpush.xpose.msra.mxu0 0.0
    %268 = vmatpush.xpose.msra.mxu0 0.0
    %269 = vmatpush.xpose.msra.mxu0 0.0
    %270 = vmatpush.xpose.msra.mxu0 0.0
    %271 = vmatpush.xpose.msra.mxu0 0.0
    %272 = vmatpush.xpose.msra.mxu0 0.0
    %273 = vmatpush.xpose.msra.mxu0 0.0
    %274 = vmatpush.xpose.msra.mxu0 0.0
    %275 = vmatpush.xpose.msra.mxu0 0.0
    %276 = vmatpush.xpose.msra.mxu0 %v260
    %277 = vmatpush.xpose.msra.mxu0 %v258
    %278 = vmatmul.f32.gmra.mxu0 %v212
    %v279 = vpop.f32.mrf.mxu0
    %v280 = vadd.f32 %v250, %v279
    %281 = vmatmul.f32.gmra.mxu0 %v215
    %v282 = vpop.f32.mrf.mxu0
    %v283 = vadd.f32 %v251, %v282
    %284 = vdwg.mxu0
    %285 = vset.pattern.permute.xlu0 1
    %286 = vperm.xlu0 %285, %v235
    %v287 = vpop.permute.xlu0 %286
    %289 = vset.pattern.permute.xlu0 1
    %290 = vperm.xlu0 %289, %v238
    %v291 = vpop.permute.xlu0 %290
    %v293 = vmul.f32 %v287, %v199
    %v294 = vmul.f32 %v291, %v200
    %v295 = vadd.f32 %v280, %v293
    %v296 = vadd.f32 %v283, %v294
    %297 = vset.pattern.permute.xlu0 2
    %298 = vperm.xlu0 %297, %v235
    %v299 = vpop.permute.xlu0 %298
    %301 = vset.pattern.permute.xlu0 2
    %302 = vperm.xlu0 %301, %v238
    %v303 = vpop.permute.xlu0 %302
    %v305 = vmul.f32 %v299, %v202
    %v306 = vmul.f32 %v303, %v203
    %v307 = vadd.f32 %v295, %v305
    %v308 = vadd.f32 %v296, %v306
    %309 = vset.pattern.permute.xlu0 3
    %310 = vperm.xlu0 %309, %v235
    %v311 = vpop.permute.xlu0 %310
    %313 = vset.pattern.permute.xlu0 3
    %314 = vperm.xlu0 %313, %v238
    %v315 = vpop.permute.xlu0 %314
    %v317 = vmul.f32 %v311, %v205
    %v318 = vmul.f32 %v315, %v206
    %v319 = vadd.f32 %v307, %v317
    %v320 = vadd.f32 %v308, %v318
    %321 = vset.pattern.permute.xlu0 4
    %322 = vperm.xlu0 %321, %v235
    %v323 = vpop.permute.xlu0 %322
    %325 = vset.pattern.permute.xlu0 4
    %326 = vperm.xlu0 %325, %v238
    %v327 = vpop.permute.xlu0 %326
    %v329 = vmul.f32 %v323, %v208
    %v330 = vmul.f32 %v327, %v209
    %v331 = vadd.f32 %v319, %v329
    %v332 = vadd.f32 %v320, %v330
    %v333 = vadd.f32 %v331, %v188
    %v334 = vadd.f32 %v332, %v189
    %vm335 = vcmask 130048
    %v336 = vsel %vm335, %v333, -inf
    %337 = vmax.xlane.f32.xlu0 %v336
    %v338 = vpop.xlane.xlu0 %337
    %v339 = vsel %vm335, %v334, -inf
    %340 = vmax.xlane.f32.xlu0 %v339
    %v341 = vpop.xlane.xlu0 %340
    %v342 = vsub.f32 %v333, %v338
    %v343 = vsub.f32 %v334, %v341
    %v344 = vmul.f32 %v342, 1.442695
    %v345 = vpow.pop %v344
    %v346 = vmul.f32 %v343, 1.442695
    %v347 = vpow.pop %v346
    %v348 = vsel %vm335, %v345, 0.0
    %349 = vadd.xlane.f32.xlu0 %v348
    %v350 = vpop.xlane.xlu0 %349
    %v351 = vsel %vm335, %v347, 0.0
    %352 = vadd.xlane.f32.xlu0 %v351
    %v353 = vpop.xlane.xlu0 %352
    %v354 = vrcp.pop %v350
    %v355 = vrcp.pop %v353
    %v356 = vmul.f32 %v345, %v354
    %v357 = vmul.f32 %v347, %v355
    %v358 = vmul.f32 %v356, %v196
    %v359 = vmul.f32 %v357, %v197
    %v360 = vsel %vm335, %v358, 0.0
    %361 = vadd.xlane.f32.xlu0 %v360
    %v362 = vpop.xlane.xlu0 %361
    %v363 = vsel %vm335, %v359, 0.0
    %364 = vadd.xlane.f32.xlu0 %v363
    %v365 = vpop.xlane.xlu0 %364
    %v366 = vperm.slane %v191, 0
    %v367 = vmul.f32 %v362, %v366
    %v368 = vmul.f32 %v365, %v366
    %369 = vrot.lane.b32.xlu0 %v181, 64
    %v370 = vpop.permute.xlu0 %369
    %371 = vrot.lane.b32.xlu0 %v184, 64
    %v372 = vpop.permute.xlu0 %371
    %v376 = vsel %vm335, %v356, 0
    %v379 = vsel %vm335, %v357, 0
    %381 = vmatpush.msra.mxu0 0.0
    %382 = vmatpush.msra.mxu0 0.0
    %383 = vmatpush.msra.mxu0 0.0
    %384 = vmatpush.msra.mxu0 0.0
    %385 = vmatpush.msra.mxu0 0.0
    %386 = vmatpush.msra.mxu0 0.0
    %387 = vmatpush.msra.mxu0 0.0
    %388 = vmatpush.msra.mxu0 0.0
    %389 = vmatpush.msra.mxu0 0.0
    %390 = vmatpush.msra.mxu0 0.0
    %391 = vmatpush.msra.mxu0 0.0
    %392 = vmatpush.msra.mxu0 0.0
    %393 = vmatpush.msra.mxu0 0.0
    %394 = vmatpush.msra.mxu0 0.0
    %395 = vmatpush.msra.mxu0 %v372
    %396 = vmatpush.msra.mxu0 %v370
    %397 = vmatmul.f32.gmra.mxu0 %v376
    %v398 = vpop.f32.mrf.mxu0
    %v399 = vadd.f32 %v367, %v398
    %400 = vmatmul.f32.gmra.mxu0 %v379
    %v401 = vpop.f32.mrf.mxu0
    %v402 = vadd.f32 %v368, %v401
    %403 = vdwg.mxu0
    %v404 = vmul.f32 %v356, %v199
    %v405 = vmul.f32 %v357, %v200
    %v406 = vsel %vm335, %v404, 0.0
    %407 = vadd.xlane.f32.xlu0 %v406
    %v408 = vpop.xlane.xlu0 %407
    %v409 = vsel %vm335, %v405, 0.0
    %410 = vadd.xlane.f32.xlu0 %v409
    %v411 = vpop.xlane.xlu0 %410
    %v412 = vperm.slane %v191, 1
    %v413 = vmul.f32 %v408, %v412
    %v414 = vmul.f32 %v411, %v412
    %v415 = vadd.f32 %v399, %v413
    %v416 = vadd.f32 %v402, %v414
    %v417 = vmul.f32 %v356, %v202
    %v418 = vmul.f32 %v357, %v203
    %v419 = vsel %vm335, %v417, 0.0
    %420 = vadd.xlane.f32.xlu0 %v419
    %v421 = vpop.xlane.xlu0 %420
    %v422 = vsel %vm335, %v418, 0.0
    %423 = vadd.xlane.f32.xlu0 %v422
    %v424 = vpop.xlane.xlu0 %423
    %v425 = vperm.slane %v191, 2
    %v426 = vmul.f32 %v421, %v425
    %v427 = vmul.f32 %v424, %v425
    %v428 = vadd.f32 %v415, %v426
    %v429 = vadd.f32 %v416, %v427
    %v430 = vmul.f32 %v356, %v205
    %v431 = vmul.f32 %v357, %v206
    %v432 = vsel %vm335, %v430, 0.0
    %433 = vadd.xlane.f32.xlu0 %v432
    %v434 = vpop.xlane.xlu0 %433
    %v435 = vsel %vm335, %v431, 0.0
    %436 = vadd.xlane.f32.xlu0 %v435
    %v437 = vpop.xlane.xlu0 %436
    %v438 = vperm.slane %v191, 3
    %v439 = vmul.f32 %v434, %v438
    %v440 = vmul.f32 %v437, %v438
    %v441 = vadd.f32 %v428, %v439
    %v442 = vadd.f32 %v429, %v440
    %v443 = vmul.f32 %v356, %v208
    %v444 = vmul.f32 %v357, %v209
    %v445 = vsel %vm335, %v443, 0.0
    %446 = vadd.xlane.f32.xlu0 %v445
    %v447 = vpop.xlane.xlu0 %446
    %v448 = vsel %vm335, %v444, 0.0
    %449 = vadd.xlane.f32.xlu0 %v448
    %v450 = vpop.xlane.xlu0 %449
    %v451 = vperm.slane %v191, 4
    %v452 = vmul.f32 %v447, %v451
    %v453 = vmul.f32 %v450, %v451
    %v454 = vadd.f32 %v441, %v452
    %v455 = vadd.f32 %v442, %v453
    %456 = vrot.lane.b32.xlu0 %v186, 120
    %v457 = vpop.permute.xlu0 %456
    %458 = vrot.lane.b32.xlu0 %v187, 120
    %v459 = vpop.permute.xlu0 %458
    %v460 = vsel %vm210, %v457, 0
    %v462 = vsel %vm210, %v459, 0
    %464 = vmatpush.msra.mxu0 0.0
    %465 = vmatpush.msra.mxu0 0.0
    %466 = vmatpush.msra.mxu0 0.0
    %467 = vmatpush.msra.mxu0 0.0
    %468 = vmatpush.msra.mxu0 0.0
    %469 = vmatpush.msra.mxu0 0.0
    %470 = vmatpush.msra.mxu0 0.0
    %471 = vmatpush.msra.mxu0 0.0
    %472 = vmatpush.msra.mxu0 0.0
    %473 = vmatpush.msra.mxu0 0.0
    %474 = vmatpush.msra.mxu0 0.0
    %475 = vmatpush.msra.mxu0 0.0
    %476 = vmatpush.msra.mxu0 0.0
    %477 = vmatpush.msra.mxu0 0.0
    %478 = vmatpush.msra.mxu0 0.0
    %479 = vmatpush.msra.mxu0 %v190
    %480 = vmatmul.f32.gmra.mxu0 %v460
    %v481 = vpop.f32.mrf.mxu0
    %v482 = vadd.f32 0.0, %v481
    %483 = vmatmul.f32.gmra.mxu0 %v462
    %v484 = vpop.f32.mrf.mxu0
    %v485 = vadd.f32 0.0, %v484
    %486 = vdwg.mxu0
    %488 = vset.pattern.permute.xlu0 0
    %489 = vperm.xlu0 %488, %v482
    %v490 = vpop.permute.xlu0 %489
    %493 = vset.pattern.permute.xlu0 0
    %494 = vperm.xlu0 %493, %v485
    %v495 = vpop.permute.xlu0 %494
    %v497 = vmul.f32 %v490, %v196
    %v498 = vmul.f32 %v495, %v197
    %499 = vrot.lane.b32.xlu0 %v181, 88
    %v500 = vpop.permute.xlu0 %499
    %501 = vrot.lane.b32.xlu0 %v184, 88
    %v502 = vpop.permute.xlu0 %501
    %v503 = vsel %vm210, %v500, 0
    %v505 = vsel %vm210, %v502, 0
    %507 = vmatpush.xpose.msra.mxu0 0.0
    %508 = vmatpush.xpose.msra.mxu0 0.0
    %509 = vmatpush.xpose.msra.mxu0 0.0
    %510 = vmatpush.xpose.msra.mxu0 0.0
    %511 = vmatpush.xpose.msra.mxu0 0.0
    %512 = vmatpush.xpose.msra.mxu0 0.0
    %513 = vmatpush.xpose.msra.mxu0 0.0
    %514 = vmatpush.xpose.msra.mxu0 0.0
    %515 = vmatpush.xpose.msra.mxu0 0.0
    %516 = vmatpush.xpose.msra.mxu0 0.0
    %517 = vmatpush.xpose.msra.mxu0 0.0
    %518 = vmatpush.xpose.msra.mxu0 0.0
    %519 = vmatpush.xpose.msra.mxu0 0.0
    %520 = vmatpush.xpose.msra.mxu0 0.0
    %521 = vmatpush.xpose.msra.mxu0 %v505
    %522 = vmatpush.xpose.msra.mxu0 %v503
    %523 = vmatmul.f32.gmra.mxu0 %v460
    %v524 = vpop.f32.mrf.mxu0
    %v525 = vadd.f32 %v497, %v524
    %526 = vmatmul.f32.gmra.mxu0 %v462
    %v527 = vpop.f32.mrf.mxu0
    %v528 = vadd.f32 %v498, %v527
    %529 = vdwg.mxu0
    %530 = vset.pattern.permute.xlu0 1
    %531 = vperm.xlu0 %530, %v482
    %v532 = vpop.permute.xlu0 %531
    %534 = vset.pattern.permute.xlu0 1
    %535 = vperm.xlu0 %534, %v485
    %v536 = vpop.permute.xlu0 %535
    %v538 = vmul.f32 %v532, %v199
    %v539 = vmul.f32 %v536, %v200
    %v540 = vadd.f32 %v525, %v538
    %v541 = vadd.f32 %v528, %v539
    %542 = vset.pattern.permute.xlu0 2
    %543 = vperm.xlu0 %542, %v482
    %v544 = vpop.permute.xlu0 %543
    %546 = vset.pattern.permute.xlu0 2
    %547 = vperm.xlu0 %546, %v485
    %v548 = vpop.permute.xlu0 %547
    %v550 = vmul.f32 %v544, %v202
    %v551 = vmul.f32 %v548, %v203
    %v552 = vadd.f32 %v540, %v550
    %v553 = vadd.f32 %v541, %v551
    %554 = vset.pattern.permute.xlu0 3
    %555 = vperm.xlu0 %554, %v482
    %v556 = vpop.permute.xlu0 %555
    %558 = vset.pattern.permute.xlu0 3
    %559 = vperm.xlu0 %558, %v485
    %v560 = vpop.permute.xlu0 %559
    %v562 = vmul.f32 %v556, %v205
    %v563 = vmul.f32 %v560, %v206
    %v564 = vadd.f32 %v552, %v562
    %v565 = vadd.f32 %v553, %v563
    %566 = vset.pattern.permute.xlu0 4
    %567 = vperm.xlu0 %566, %v482
    %v568 = vpop.permute.xlu0 %567
    %570 = vset.pattern.permute.xlu0 4
    %571 = vperm.xlu0 %570, %v485
    %v572 = vpop.permute.xlu0 %571
    %v574 = vmul.f32 %v568, %v208
    %v575 = vmul.f32 %v572, %v209
    %v576 = vadd.f32 %v564, %v574
    %v577 = vadd.f32 %v565, %v575
    %v578 = vadd.f32 %v576, %v188
    %v579 = vadd.f32 %v577, %v189
    %v580 = vsel %vm335, %v578, -inf
    %581 = vmax.xlane.f32.xlu0 %v580
    %v582 = vpop.xlane.xlu0 %581
    %v583 = vsel %vm335, %v579, -inf
    %584 = vmax.xlane.f32.xlu0 %v583
    %v585 = vpop.xlane.xlu0 %584
    %v586 = vsub.f32 %v578, %v582
    %v587 = vsub.f32 %v579, %v585
    %v588 = vmul.f32 %v586, 1.442695
    %v589 = vpow.pop %v588
    %v590 = vmul.f32 %v587, 1.442695
    %v591 = vpow.pop %v590
    %v592 = vsel %vm335, %v589, 0.0
    %593 = vadd.xlane.f32.xlu0 %v592
    %v594 = vpop.xlane.xlu0 %593
    %v595 = vsel %vm335, %v591, 0.0
    %596 = vadd.xlane.f32.xlu0 %v595
    %v597 = vpop.xlane.xlu0 %596
    %v598 = vrcp.pop %v594
    %v599 = vrcp.pop %v597
    %v600 = vmul.f32 %v589, %v598
    %v601 = vmul.f32 %v591, %v599
    %v602 = vmul.f32 %v600, %v196
    %v603 = vmul.f32 %v601, %v197
    %v604 = vsel %vm335, %v602, 0.0
    %605 = vadd.xlane.f32.xlu0 %v604
    %v606 = vpop.xlane.xlu0 %605
    %v607 = vsel %vm335, %v603, 0.0
    %608 = vadd.xlane.f32.xlu0 %v607
    %v609 = vpop.xlane.xlu0 %608
    %v610 = vmul.f32 %v606, %v366
    %v611 = vmul.f32 %v609, %v366
    %612 = vrot.lane.b32.xlu0 %v181, 56
    %v613 = vpop.permute.xlu0 %612
    %614 = vrot.lane.b32.xlu0 %v184, 56
    %v615 = vpop.permute.xlu0 %614
    %v619 = vsel %vm335, %v600, 0
    %v622 = vsel %vm335, %v601, 0
    %624 = vmatpush.msra.mxu0 0.0
    %625 = vmatpush.msra.mxu0 0.0
    %626 = vmatpush.msra.mxu0 0.0
    %627 = vmatpush.msra.mxu0 0.0
    %628 = vmatpush.msra.mxu0 0.0
    %629 = vmatpush.msra.mxu0 0.0
    %630 = vmatpush.msra.mxu0 0.0
    %631 = vmatpush.msra.mxu0 0.0
    %632 = vmatpush.msra.mxu0 0.0
    %633 = vmatpush.msra.mxu0 0.0
    %634 = vmatpush.msra.mxu0 0.0
    %635 = vmatpush.msra.mxu0 0.0
    %636 = vmatpush.msra.mxu0 0.0
    %637 = vmatpush.msra.mxu0 0.0
    %638 = vmatpush.msra.mxu0 %v615
    %639 = vmatpush.msra.mxu0 %v613
    %640 = vmatmul.f32.gmra.mxu0 %v619
    %v641 = vpop.f32.mrf.mxu0
    %v642 = vadd.f32 %v610, %v641
    %643 = vmatmul.f32.gmra.mxu0 %v622
    %v644 = vpop.f32.mrf.mxu0
    %v645 = vadd.f32 %v611, %v644
    %646 = vdwg.mxu0
    %v647 = vmul.f32 %v600, %v199
    %v648 = vmul.f32 %v601, %v200
    %v649 = vsel %vm335, %v647, 0.0
    %650 = vadd.xlane.f32.xlu0 %v649
    %v651 = vpop.xlane.xlu0 %650
    %v652 = vsel %vm335, %v648, 0.0
    %653 = vadd.xlane.f32.xlu0 %v652
    %v654 = vpop.xlane.xlu0 %653
    %v655 = vmul.f32 %v651, %v412
    %v656 = vmul.f32 %v654, %v412
    %v657 = vadd.f32 %v642, %v655
    %v658 = vadd.f32 %v645, %v656
    %v659 = vmul.f32 %v600, %v202
    %v660 = vmul.f32 %v601, %v203
    %v661 = vsel %vm335, %v659, 0.0
    %662 = vadd.xlane.f32.xlu0 %v661
    %v663 = vpop.xlane.xlu0 %662
    %v664 = vsel %vm335, %v660, 0.0
    %665 = vadd.xlane.f32.xlu0 %v664
    %v666 = vpop.xlane.xlu0 %665
    %v667 = vmul.f32 %v663, %v425
    %v668 = vmul.f32 %v666, %v425
    %v669 = vadd.f32 %v657, %v667
    %v670 = vadd.f32 %v658, %v668
    %v671 = vmul.f32 %v600, %v205
    %v672 = vmul.f32 %v601, %v206
    %v673 = vsel %vm335, %v671, 0.0
    %674 = vadd.xlane.f32.xlu0 %v673
    %v675 = vpop.xlane.xlu0 %674
    %v676 = vsel %vm335, %v672, 0.0
    %677 = vadd.xlane.f32.xlu0 %v676
    %v678 = vpop.xlane.xlu0 %677
    %v679 = vmul.f32 %v675, %v438
    %v680 = vmul.f32 %v678, %v438
    %v681 = vadd.f32 %v669, %v679
    %v682 = vadd.f32 %v670, %v680
    %v683 = vmul.f32 %v600, %v208
    %v684 = vmul.f32 %v601, %v209
    %v685 = vsel %vm335, %v683, 0.0
    %686 = vadd.xlane.f32.xlu0 %v685
    %v687 = vpop.xlane.xlu0 %686
    %v688 = vsel %vm335, %v684, 0.0
    %689 = vadd.xlane.f32.xlu0 %v688
    %v690 = vpop.xlane.xlu0 %689
    %v691 = vmul.f32 %v687, %v451
    %v692 = vmul.f32 %v690, %v451
    %v693 = vadd.f32 %v681, %v691
    %v694 = vadd.f32 %v682, %v692
    %v696 = vsel %vm210, %v693, 0
    %v699 = vsel %vm210, %v694, 0
    %701 = vmatpush.msra.mxu0 0.0
    %702 = vmatpush.msra.mxu0 0.0
    %703 = vmatpush.msra.mxu0 0.0
    %704 = vmatpush.msra.mxu0 0.0
    %705 = vmatpush.msra.mxu0 0.0
    %706 = vmatpush.msra.mxu0 0.0
    %707 = vmatpush.msra.mxu0 0.0
    %708 = vmatpush.msra.mxu0 0.0
    %709 = vmatpush.msra.mxu0 0.0
    %710 = vmatpush.msra.mxu0 0.0
    %711 = vmatpush.msra.mxu0 0.0
    %712 = vmatpush.msra.mxu0 0.0
    %713 = vmatpush.msra.mxu0 0.0
    %714 = vmatpush.msra.mxu0 0.0
    %715 = vmatpush.msra.mxu0 0.0
    %716 = vmatpush.msra.mxu0 %v193
    %717 = vmatmul.f32.gmra.mxu0 %v696
    %v718 = vpop.f32.mrf.mxu0
    %v719 = vadd.f32 0.0, %v718
    %720 = vmatmul.f32.gmra.mxu0 %v699
    %v721 = vpop.f32.mrf.mxu0
    %v722 = vadd.f32 0.0, %v721
    %723 = vdwg.mxu0
    %v725 = vsel %vm210, %v454, 0
    %v728 = vsel %vm210, %v455, 0
    %730 = vmatpush.msra.mxu0 0.0
    %731 = vmatpush.msra.mxu0 0.0
    %732 = vmatpush.msra.mxu0 0.0
    %733 = vmatpush.msra.mxu0 0.0
    %734 = vmatpush.msra.mxu0 0.0
    %735 = vmatpush.msra.mxu0 0.0
    %736 = vmatpush.msra.mxu0 0.0
    %737 = vmatpush.msra.mxu0 0.0
    %738 = vmatpush.msra.mxu0 0.0
    %739 = vmatpush.msra.mxu0 0.0
    %740 = vmatpush.msra.mxu0 0.0
    %741 = vmatpush.msra.mxu0 0.0
    %742 = vmatpush.msra.mxu0 0.0
    %743 = vmatpush.msra.mxu0 0.0
    %744 = vmatpush.msra.mxu0 0.0
    %745 = vmatpush.msra.mxu0 %v192
    %746 = vmatmul.f32.gmra.mxu0 %v725
    %v747 = vpop.f32.mrf.mxu0
    %v748 = vadd.f32 %v719, %v747
    %749 = vmatmul.f32.gmra.mxu0 %v728
    %v750 = vpop.f32.mrf.mxu0
    %v751 = vadd.f32 %v722, %v750
    %752 = vdwg.mxu0
    %753 = vrot.lane.b32.xlu0 %v186, 112
    %v754 = vpop.permute.xlu0 %753
    %755 = vrot.lane.b32.xlu0 %v187, 112
    %v756 = vpop.permute.xlu0 %755
    %v757 = vsel %vm210, %v754, 0
    %v759 = vsel %vm210, %v756, 0
    %761 = vmatpush.msra.mxu0 0.0
    %762 = vmatpush.msra.mxu0 0.0
    %763 = vmatpush.msra.mxu0 0.0
    %764 = vmatpush.msra.mxu0 0.0
    %765 = vmatpush.msra.mxu0 0.0
    %766 = vmatpush.msra.mxu0 0.0
    %767 = vmatpush.msra.mxu0 0.0
    %768 = vmatpush.msra.mxu0 0.0
    %769 = vmatpush.msra.mxu0 0.0
    %770 = vmatpush.msra.mxu0 0.0
    %771 = vmatpush.msra.mxu0 0.0
    %772 = vmatpush.msra.mxu0 0.0
    %773 = vmatpush.msra.mxu0 0.0
    %774 = vmatpush.msra.mxu0 0.0
    %775 = vmatpush.msra.mxu0 0.0
    %776 = vmatpush.msra.mxu0 %v190
    %777 = vmatmul.f32.gmra.mxu0 %v757
    %v778 = vpop.f32.mrf.mxu0
    %v779 = vadd.f32 0.0, %v778
    %780 = vmatmul.f32.gmra.mxu0 %v759
    %v781 = vpop.f32.mrf.mxu0
    %v782 = vadd.f32 0.0, %v781
    %783 = vdwg.mxu0
    %785 = vset.pattern.permute.xlu0 0
    %786 = vperm.xlu0 %785, %v779
    %v787 = vpop.permute.xlu0 %786
    %790 = vset.pattern.permute.xlu0 0
    %791 = vperm.xlu0 %790, %v782
    %v792 = vpop.permute.xlu0 %791
    %v794 = vmul.f32 %v787, %v196
    %v795 = vmul.f32 %v792, %v197
    %796 = vrot.lane.b32.xlu0 %v181, 80
    %v797 = vpop.permute.xlu0 %796
    %798 = vrot.lane.b32.xlu0 %v184, 80
    %v799 = vpop.permute.xlu0 %798
    %v800 = vsel %vm210, %v797, 0
    %v802 = vsel %vm210, %v799, 0
    %804 = vmatpush.xpose.msra.mxu0 0.0
    %805 = vmatpush.xpose.msra.mxu0 0.0
    %806 = vmatpush.xpose.msra.mxu0 0.0
    %807 = vmatpush.xpose.msra.mxu0 0.0
    %808 = vmatpush.xpose.msra.mxu0 0.0
    %809 = vmatpush.xpose.msra.mxu0 0.0
    %810 = vmatpush.xpose.msra.mxu0 0.0
    %811 = vmatpush.xpose.msra.mxu0 0.0
    %812 = vmatpush.xpose.msra.mxu0 0.0
    %813 = vmatpush.xpose.msra.mxu0 0.0
    %814 = vmatpush.xpose.msra.mxu0 0.0
    %815 = vmatpush.xpose.msra.mxu0 0.0
    %816 = vmatpush.xpose.msra.mxu0 0.0
    %817 = vmatpush.xpose.msra.mxu0 0.0
    %818 = vmatpush.xpose.msra.mxu0 %v802
    %819 = vmatpush.xpose.msra.mxu0 %v800
    %820 = vmatmul.f32.gmra.mxu0 %v757
    %v821 = vpop.f32.mrf.mxu0
    %v822 = vadd.f32 %v794, %v821
    %823 = vmatmul.f32.gmra.mxu0 %v759
    %v824 = vpop.f32.mrf.mxu0
    %v825 = vadd.f32 %v795, %v824
    %826 = vdwg.mxu0
    %827 = vset.pattern.permute.xlu0 1
    %828 = vperm.xlu0 %827, %v779
    %v829 = vpop.permute.xlu0 %828
    %831 = vset.pattern.permute.xlu0 1
    %832 = vperm.xlu0 %831, %v782
    %v833 = vpop.permute.xlu0 %832
    %v835 = vmul.f32 %v829, %v199
    %v836 = vmul.f32 %v833, %v200
    %v837 = vadd.f32 %v822, %v835
    %v838 = vadd.f32 %v825, %v836
    %839 = vset.pattern.permute.xlu0 2
    %840 = vperm.xlu0 %839, %v779
    %v841 = vpop.permute.xlu0 %840
    %843 = vset.pattern.permute.xlu0 2
    %844 = vperm.xlu0 %843, %v782
    %v845 = vpop.permute.xlu0 %844
    %v847 = vmul.f32 %v841, %v202
    %v848 = vmul.f32 %v845, %v203
    %v849 = vadd.f32 %v837, %v847
    %v850 = vadd.f32 %v838, %v848
    %851 = vset.pattern.permute.xlu0 3
    %852 = vperm.xlu0 %851, %v779
    %v853 = vpop.permute.xlu0 %852
    %855 = vset.pattern.permute.xlu0 3
    %856 = vperm.xlu0 %855, %v782
    %v857 = vpop.permute.xlu0 %856
    %v859 = vmul.f32 %v853, %v205
    %v860 = vmul.f32 %v857, %v206
    %v861 = vadd.f32 %v849, %v859
    %v862 = vadd.f32 %v850, %v860
    %863 = vset.pattern.permute.xlu0 4
    %864 = vperm.xlu0 %863, %v779
    %v865 = vpop.permute.xlu0 %864
    %867 = vset.pattern.permute.xlu0 4
    %868 = vperm.xlu0 %867, %v782
    %v869 = vpop.permute.xlu0 %868
    %v871 = vmul.f32 %v865, %v208
    %v872 = vmul.f32 %v869, %v209
    %v873 = vadd.f32 %v861, %v871
    %v874 = vadd.f32 %v862, %v872
    %v875 = vadd.f32 %v873, %v188
    %v876 = vadd.f32 %v874, %v189
    %v877 = vsel %vm335, %v875, -inf
    %878 = vmax.xlane.f32.xlu0 %v877
    %v879 = vpop.xlane.xlu0 %878
    %v880 = vsel %vm335, %v876, -inf
    %881 = vmax.xlane.f32.xlu0 %v880
    %v882 = vpop.xlane.xlu0 %881
    %v883 = vsub.f32 %v875, %v879
    %v884 = vsub.f32 %v876, %v882
    %v885 = vmul.f32 %v883, 1.442695
    %v886 = vpow.pop %v885
    %v887 = vmul.f32 %v884, 1.442695
    %v888 = vpow.pop %v887
    %v889 = vsel %vm335, %v886, 0.0
    %890 = vadd.xlane.f32.xlu0 %v889
    %v891 = vpop.xlane.xlu0 %890
    %v892 = vsel %vm335, %v888, 0.0
    %893 = vadd.xlane.f32.xlu0 %v892
    %v894 = vpop.xlane.xlu0 %893
    %v895 = vrcp.pop %v891
    %v896 = vrcp.pop %v894
    %v897 = vmul.f32 %v886, %v895
    %v898 = vmul.f32 %v888, %v896
    %v899 = vmul.f32 %v897, %v196
    %v900 = vmul.f32 %v898, %v197
    %v901 = vsel %vm335, %v899, 0.0
    %902 = vadd.xlane.f32.xlu0 %v901
    %v903 = vpop.xlane.xlu0 %902
    %v904 = vsel %vm335, %v900, 0.0
    %905 = vadd.xlane.f32.xlu0 %v904
    %v906 = vpop.xlane.xlu0 %905
    %v907 = vmul.f32 %v903, %v366
    %v908 = vmul.f32 %v906, %v366
    %909 = vrot.lane.b32.xlu0 %v181, 48
    %v910 = vpop.permute.xlu0 %909
    %911 = vrot.lane.b32.xlu0 %v184, 48
    %v912 = vpop.permute.xlu0 %911
    %v916 = vsel %vm335, %v897, 0
    %v919 = vsel %vm335, %v898, 0
    %921 = vmatpush.msra.mxu0 0.0
    %922 = vmatpush.msra.mxu0 0.0
    %923 = vmatpush.msra.mxu0 0.0
    %924 = vmatpush.msra.mxu0 0.0
    %925 = vmatpush.msra.mxu0 0.0
    %926 = vmatpush.msra.mxu0 0.0
    %927 = vmatpush.msra.mxu0 0.0
    %928 = vmatpush.msra.mxu0 0.0
    %929 = vmatpush.msra.mxu0 0.0
    %930 = vmatpush.msra.mxu0 0.0
    %931 = vmatpush.msra.mxu0 0.0
    %932 = vmatpush.msra.mxu0 0.0
    %933 = vmatpush.msra.mxu0 0.0
    %934 = vmatpush.msra.mxu0 0.0
    %935 = vmatpush.msra.mxu0 %v912
    %936 = vmatpush.msra.mxu0 %v910
    %937 = vmatmul.f32.gmra.mxu0 %v916
    %v938 = vpop.f32.mrf.mxu0
    %v939 = vadd.f32 %v907, %v938
    %940 = vmatmul.f32.gmra.mxu0 %v919
    %v941 = vpop.f32.mrf.mxu0
    %v942 = vadd.f32 %v908, %v941
    %943 = vdwg.mxu0
    %v944 = vmul.f32 %v897, %v199
    %v945 = vmul.f32 %v898, %v200
    %v946 = vsel %vm335, %v944, 0.0
    %947 = vadd.xlane.f32.xlu0 %v946
    %v948 = vpop.xlane.xlu0 %947
    %v949 = vsel %vm335, %v945, 0.0
    %950 = vadd.xlane.f32.xlu0 %v949
    %v951 = vpop.xlane.xlu0 %950
    %v952 = vmul.f32 %v948, %v412
    %v953 = vmul.f32 %v951, %v412
    %v954 = vadd.f32 %v939, %v952
    %v955 = vadd.f32 %v942, %v953
    %v956 = vmul.f32 %v897, %v202
    %v957 = vmul.f32 %v898, %v203
    %v958 = vsel %vm335, %v956, 0.0
    %959 = vadd.xlane.f32.xlu0 %v958
    %v960 = vpop.xlane.xlu0 %959
    %v961 = vsel %vm335, %v957, 0.0
    %962 = vadd.xlane.f32.xlu0 %v961
    %v963 = vpop.xlane.xlu0 %962
    %v964 = vmul.f32 %v960, %v425
    %v965 = vmul.f32 %v963, %v425
    %v966 = vadd.f32 %v954, %v964
    %v967 = vadd.f32 %v955, %v965
    %v968 = vmul.f32 %v897, %v205
    %v969 = vmul.f32 %v898, %v206
    %v970 = vsel %vm335, %v968, 0.0
    %971 = vadd.xlane.f32.xlu0 %v970
    %v972 = vpop.xlane.xlu0 %971
    %v973 = vsel %vm335, %v969, 0.0
    %974 = vadd.xlane.f32.xlu0 %v973
    %v975 = vpop.xlane.xlu0 %974
    %v976 = vmul.f32 %v972, %v438
    %v977 = vmul.f32 %v975, %v438
    %v978 = vadd.f32 %v966, %v976
    %v979 = vadd.f32 %v967, %v977
    %v980 = vmul.f32 %v897, %v208
    %v981 = vmul.f32 %v898, %v209
    %v982 = vsel %vm335, %v980, 0.0
    %983 = vadd.xlane.f32.xlu0 %v982
    %v984 = vpop.xlane.xlu0 %983
    %v985 = vsel %vm335, %v981, 0.0
    %986 = vadd.xlane.f32.xlu0 %v985
    %v987 = vpop.xlane.xlu0 %986
    %v988 = vmul.f32 %v984, %v451
    %v989 = vmul.f32 %v987, %v451
    %v990 = vadd.f32 %v978, %v988
    %v991 = vadd.f32 %v979, %v989
    %v993 = vsel %vm210, %v990, 0
    %v996 = vsel %vm210, %v991, 0
    %998 = vmatpush.msra.mxu0 0.0
    %999 = vmatpush.msra.mxu0 0.0
    %1000 = vmatpush.msra.mxu0 0.0
    %1001 = vmatpush.msra.mxu0 0.0
    %1002 = vmatpush.msra.mxu0 0.0
    %1003 = vmatpush.msra.mxu0 0.0
    %1004 = vmatpush.msra.mxu0 0.0
    %1005 = vmatpush.msra.mxu0 0.0
    %1006 = vmatpush.msra.mxu0 0.0
    %1007 = vmatpush.msra.mxu0 0.0
    %1008 = vmatpush.msra.mxu0 0.0
    %1009 = vmatpush.msra.mxu0 0.0
    %1010 = vmatpush.msra.mxu0 0.0
    %1011 = vmatpush.msra.mxu0 0.0
    %1012 = vmatpush.msra.mxu0 0.0
    %1013 = vmatpush.msra.mxu0 %v194
    %1014 = vmatmul.f32.gmra.mxu0 %v993
    %v1015 = vpop.f32.mrf.mxu0
    %v1016 = vadd.f32 0.0, %v1015
    %1017 = vmatmul.f32.gmra.mxu0 %v996
    %v1018 = vpop.f32.mrf.mxu0
    %v1019 = vadd.f32 0.0, %v1018
    %1020 = vdwg.mxu0
    %v1021 = vadd.f32 %v748, %v1016
    %v1022 = vadd.f32 %v751, %v1019
    %1023 = vrot.lane.b32.xlu0 %v186, 104
    %v1024 = vpop.permute.xlu0 %1023
    %1025 = vrot.lane.b32.xlu0 %v187, 104
    %v1026 = vpop.permute.xlu0 %1025
    %v1027 = vsel %vm210, %v1024, 0
    %v1029 = vsel %vm210, %v1026, 0
    %1031 = vmatpush.msra.mxu0 0.0
    %1032 = vmatpush.msra.mxu0 0.0
    %1033 = vmatpush.msra.mxu0 0.0
    %1034 = vmatpush.msra.mxu0 0.0
    %1035 = vmatpush.msra.mxu0 0.0
    %1036 = vmatpush.msra.mxu0 0.0
    %1037 = vmatpush.msra.mxu0 0.0
    %1038 = vmatpush.msra.mxu0 0.0
    %1039 = vmatpush.msra.mxu0 0.0
    %1040 = vmatpush.msra.mxu0 0.0
    %1041 = vmatpush.msra.mxu0 0.0
    %1042 = vmatpush.msra.mxu0 0.0
    %1043 = vmatpush.msra.mxu0 0.0
    %1044 = vmatpush.msra.mxu0 0.0
    %1045 = vmatpush.msra.mxu0 0.0
    %1046 = vmatpush.msra.mxu0 %v190
    %1047 = vmatmul.f32.gmra.mxu0 %v1027
    %v1048 = vpop.f32.mrf.mxu0
    %v1049 = vadd.f32 0.0, %v1048
    %1050 = vmatmul.f32.gmra.mxu0 %v1029
    %v1051 = vpop.f32.mrf.mxu0
    %v1052 = vadd.f32 0.0, %v1051
    %1053 = vdwg.mxu0
    %1055 = vset.pattern.permute.xlu0 0
    %1056 = vperm.xlu0 %1055, %v1049
    %v1057 = vpop.permute.xlu0 %1056
    %1060 = vset.pattern.permute.xlu0 0
    %1061 = vperm.xlu0 %1060, %v1052
    %v1062 = vpop.permute.xlu0 %1061
    %v1064 = vmul.f32 %v1057, %v196
    %v1065 = vmul.f32 %v1062, %v197
    %1066 = vrot.lane.b32.xlu0 %v181, 72
    %v1067 = vpop.permute.xlu0 %1066
    %1068 = vrot.lane.b32.xlu0 %v184, 72
    %v1069 = vpop.permute.xlu0 %1068
    %v1070 = vsel %vm210, %v1067, 0
    %v1072 = vsel %vm210, %v1069, 0
    %1074 = vmatpush.xpose.msra.mxu0 0.0
    %1075 = vmatpush.xpose.msra.mxu0 0.0
    %1076 = vmatpush.xpose.msra.mxu0 0.0
    %1077 = vmatpush.xpose.msra.mxu0 0.0
    %1078 = vmatpush.xpose.msra.mxu0 0.0
    %1079 = vmatpush.xpose.msra.mxu0 0.0
    %1080 = vmatpush.xpose.msra.mxu0 0.0
    %1081 = vmatpush.xpose.msra.mxu0 0.0
    %1082 = vmatpush.xpose.msra.mxu0 0.0
    %1083 = vmatpush.xpose.msra.mxu0 0.0
    %1084 = vmatpush.xpose.msra.mxu0 0.0
    %1085 = vmatpush.xpose.msra.mxu0 0.0
    %1086 = vmatpush.xpose.msra.mxu0 0.0
    %1087 = vmatpush.xpose.msra.mxu0 0.0
    %1088 = vmatpush.xpose.msra.mxu0 %v1072
    %1089 = vmatpush.xpose.msra.mxu0 %v1070
    %1090 = vmatmul.f32.gmra.mxu0 %v1027
    %v1091 = vpop.f32.mrf.mxu0
    %v1092 = vadd.f32 %v1064, %v1091
    %1093 = vmatmul.f32.gmra.mxu0 %v1029
    %v1094 = vpop.f32.mrf.mxu0
    %v1095 = vadd.f32 %v1065, %v1094
    %1096 = vdwg.mxu0
    %1097 = vset.pattern.permute.xlu0 1
    %1098 = vperm.xlu0 %1097, %v1049
    %v1099 = vpop.permute.xlu0 %1098
    %1101 = vset.pattern.permute.xlu0 1
    %1102 = vperm.xlu0 %1101, %v1052
    %v1103 = vpop.permute.xlu0 %1102
    %v1105 = vmul.f32 %v1099, %v199
    %v1106 = vmul.f32 %v1103, %v200
    %v1107 = vadd.f32 %v1092, %v1105
    %v1108 = vadd.f32 %v1095, %v1106
    %1109 = vset.pattern.permute.xlu0 2
    %1110 = vperm.xlu0 %1109, %v1049
    %v1111 = vpop.permute.xlu0 %1110
    %1113 = vset.pattern.permute.xlu0 2
    %1114 = vperm.xlu0 %1113, %v1052
    %v1115 = vpop.permute.xlu0 %1114
    %v1117 = vmul.f32 %v1111, %v202
    %v1118 = vmul.f32 %v1115, %v203
    %v1119 = vadd.f32 %v1107, %v1117
    %v1120 = vadd.f32 %v1108, %v1118
    %1121 = vset.pattern.permute.xlu0 3
    %1122 = vperm.xlu0 %1121, %v1049
    %v1123 = vpop.permute.xlu0 %1122
    %1125 = vset.pattern.permute.xlu0 3
    %1126 = vperm.xlu0 %1125, %v1052
    %v1127 = vpop.permute.xlu0 %1126
    %v1129 = vmul.f32 %v1123, %v205
    %v1130 = vmul.f32 %v1127, %v206
    %v1131 = vadd.f32 %v1119, %v1129
    %v1132 = vadd.f32 %v1120, %v1130
    %1133 = vset.pattern.permute.xlu0 4
    %1134 = vperm.xlu0 %1133, %v1049
    %v1135 = vpop.permute.xlu0 %1134
    %1137 = vset.pattern.permute.xlu0 4
    %1138 = vperm.xlu0 %1137, %v1052
    %v1139 = vpop.permute.xlu0 %1138
    %v1141 = vmul.f32 %v1135, %v208
    %v1142 = vmul.f32 %v1139, %v209
    %v1143 = vadd.f32 %v1131, %v1141
    %v1144 = vadd.f32 %v1132, %v1142
    %v1145 = vadd.f32 %v1143, %v188
    %v1146 = vadd.f32 %v1144, %v189
    %v1147 = vsel %vm335, %v1145, -inf
    %1148 = vmax.xlane.f32.xlu0 %v1147
    %v1149 = vpop.xlane.xlu0 %1148
    %v1150 = vsel %vm335, %v1146, -inf
    %1151 = vmax.xlane.f32.xlu0 %v1150
    %v1152 = vpop.xlane.xlu0 %1151
    %v1153 = vsub.f32 %v1145, %v1149
    %v1154 = vsub.f32 %v1146, %v1152
    %v1155 = vmul.f32 %v1153, 1.442695
    %v1156 = vpow.pop %v1155
    %v1157 = vmul.f32 %v1154, 1.442695
    %v1158 = vpow.pop %v1157
    %v1159 = vsel %vm335, %v1156, 0.0
    %1160 = vadd.xlane.f32.xlu0 %v1159
    %v1161 = vpop.xlane.xlu0 %1160
    %v1162 = vsel %vm335, %v1158, 0.0
    %1163 = vadd.xlane.f32.xlu0 %v1162
    %v1164 = vpop.xlane.xlu0 %1163
    %v1165 = vrcp.pop %v1161
    %v1166 = vrcp.pop %v1164
    %v1167 = vmul.f32 %v1156, %v1165
    %v1168 = vmul.f32 %v1158, %v1166
    %v1169 = vmul.f32 %v1167, %v196
    %v1170 = vmul.f32 %v1168, %v197
    %v1171 = vsel %vm335, %v1169, 0.0
    %1172 = vadd.xlane.f32.xlu0 %v1171
    %v1173 = vpop.xlane.xlu0 %1172
    %v1174 = vsel %vm335, %v1170, 0.0
    %1175 = vadd.xlane.f32.xlu0 %v1174
    %v1176 = vpop.xlane.xlu0 %1175
    %v1177 = vmul.f32 %v1173, %v366
    %v1178 = vmul.f32 %v1176, %v366
    %1179 = vrot.lane.b32.xlu0 %v181, 40
    %v1180 = vpop.permute.xlu0 %1179
    %1181 = vrot.lane.b32.xlu0 %v184, 40
    %v1182 = vpop.permute.xlu0 %1181
    %v1186 = vsel %vm335, %v1167, 0
    %v1189 = vsel %vm335, %v1168, 0
    %1191 = vmatpush.msra.mxu0 0.0
    %1192 = vmatpush.msra.mxu0 0.0
    %1193 = vmatpush.msra.mxu0 0.0
    %1194 = vmatpush.msra.mxu0 0.0
    %1195 = vmatpush.msra.mxu0 0.0
    %1196 = vmatpush.msra.mxu0 0.0
    %1197 = vmatpush.msra.mxu0 0.0
    %1198 = vmatpush.msra.mxu0 0.0
    %1199 = vmatpush.msra.mxu0 0.0
    %1200 = vmatpush.msra.mxu0 0.0
    %1201 = vmatpush.msra.mxu0 0.0
    %1202 = vmatpush.msra.mxu0 0.0
    %1203 = vmatpush.msra.mxu0 0.0
    %1204 = vmatpush.msra.mxu0 0.0
    %1205 = vmatpush.msra.mxu0 %v1182
    %1206 = vmatpush.msra.mxu0 %v1180
    %1207 = vmatmul.f32.gmra.mxu0 %v1186
    %v1208 = vpop.f32.mrf.mxu0
    %v1209 = vadd.f32 %v1177, %v1208
    %1210 = vmatmul.f32.gmra.mxu0 %v1189
    %v1211 = vpop.f32.mrf.mxu0
    %v1212 = vadd.f32 %v1178, %v1211
    %1213 = vdwg.mxu0
    %v1214 = vmul.f32 %v1167, %v199
    %v1215 = vmul.f32 %v1168, %v200
    %v1216 = vsel %vm335, %v1214, 0.0
    %1217 = vadd.xlane.f32.xlu0 %v1216
    %v1218 = vpop.xlane.xlu0 %1217
    %v1219 = vsel %vm335, %v1215, 0.0
    %1220 = vadd.xlane.f32.xlu0 %v1219
    %v1221 = vpop.xlane.xlu0 %1220
    %v1222 = vmul.f32 %v1218, %v412
    %v1223 = vmul.f32 %v1221, %v412
    %v1224 = vadd.f32 %v1209, %v1222
    %v1225 = vadd.f32 %v1212, %v1223
    %v1226 = vmul.f32 %v1167, %v202
    %v1227 = vmul.f32 %v1168, %v203
    %v1228 = vsel %vm335, %v1226, 0.0
    %1229 = vadd.xlane.f32.xlu0 %v1228
    %v1230 = vpop.xlane.xlu0 %1229
    %v1231 = vsel %vm335, %v1227, 0.0
    %1232 = vadd.xlane.f32.xlu0 %v1231
    %v1233 = vpop.xlane.xlu0 %1232
    %v1234 = vmul.f32 %v1230, %v425
    %v1235 = vmul.f32 %v1233, %v425
    %v1236 = vadd.f32 %v1224, %v1234
    %v1237 = vadd.f32 %v1225, %v1235
    %v1238 = vmul.f32 %v1167, %v205
    %v1239 = vmul.f32 %v1168, %v206
    %v1240 = vsel %vm335, %v1238, 0.0
    %1241 = vadd.xlane.f32.xlu0 %v1240
    %v1242 = vpop.xlane.xlu0 %1241
    %v1243 = vsel %vm335, %v1239, 0.0
    %1244 = vadd.xlane.f32.xlu0 %v1243
    %v1245 = vpop.xlane.xlu0 %1244
    %v1246 = vmul.f32 %v1242, %v438
    %v1247 = vmul.f32 %v1245, %v438
    %v1248 = vadd.f32 %v1236, %v1246
    %v1249 = vadd.f32 %v1237, %v1247
    %v1250 = vmul.f32 %v1167, %v208
    %v1251 = vmul.f32 %v1168, %v209
    %v1252 = vsel %vm335, %v1250, 0.0
    %1253 = vadd.xlane.f32.xlu0 %v1252
    %v1254 = vpop.xlane.xlu0 %1253
    %v1255 = vsel %vm335, %v1251, 0.0
    %1256 = vadd.xlane.f32.xlu0 %v1255
    %v1257 = vpop.xlane.xlu0 %1256
    %v1258 = vmul.f32 %v1254, %v451
    %v1259 = vmul.f32 %v1257, %v451
    %v1260 = vadd.f32 %v1248, %v1258
    %v1261 = vadd.f32 %v1249, %v1259
    %v1263 = vsel %vm210, %v1260, 0
    %v1266 = vsel %vm210, %v1261, 0
    %1268 = vmatpush.msra.mxu0 0.0
    %1269 = vmatpush.msra.mxu0 0.0
    %1270 = vmatpush.msra.mxu0 0.0
    %1271 = vmatpush.msra.mxu0 0.0
    %1272 = vmatpush.msra.mxu0 0.0
    %1273 = vmatpush.msra.mxu0 0.0
    %1274 = vmatpush.msra.mxu0 0.0
    %1275 = vmatpush.msra.mxu0 0.0
    %1276 = vmatpush.msra.mxu0 0.0
    %1277 = vmatpush.msra.mxu0 0.0
    %1278 = vmatpush.msra.mxu0 0.0
    %1279 = vmatpush.msra.mxu0 0.0
    %1280 = vmatpush.msra.mxu0 0.0
    %1281 = vmatpush.msra.mxu0 0.0
    %1282 = vmatpush.msra.mxu0 0.0
    %1283 = vmatpush.msra.mxu0 %v195
    %1284 = vmatmul.f32.gmra.mxu0 %v1263
    %v1285 = vpop.f32.mrf.mxu0
    %v1286 = vadd.f32 0.0, %v1285
    %1287 = vmatmul.f32.gmra.mxu0 %v1266
    %v1288 = vpop.f32.mrf.mxu0
    %v1289 = vadd.f32 0.0, %v1288
    %1290 = vdwg.mxu0
    %v1291 = vadd.f32 %v1021, %v1286
    %v1292 = vadd.f32 %v1022, %v1289
    %v1293 = vld [vmem:[%s4] sm:$0x1]
    %v1295 = vperm.slane %v1293, 0
    %v1297 = vadd.f32 %v1291, %v1295
    %v1298 = vadd.f32 %v1292, %v1295
    %vm1299 = vcmask 261120
    %1300 = vst.msk [vmem:[#allocation14] sm:$0xff] %vm1299, %v1297
    %1301 = vst.msk [vmem:[#allocation14 + $0x8] sm:$0xff] %vm1299, %v1298
    // Predicated region
    $region66: #{tpu_custom_call.1} parent=1 // pred_check
      _
    $region67: #{tpu_custom_call.1} parent=1 // pred_check_branch
      %1303 = sbr.rel (0) target = $region69
    $region68: #{tpu_custom_call.1} parent=1 // pred_region
      %1305 = vsyncadd [#allocation4], 0
      %s1306 = sshll.u32 [#allocation14], 4
      %s1307 = int_to_ptr.vmem [resolvable:$true] %s1306
      %s1308 = sshll.u32 %s9, 4
      %s1309 = int_to_ptr.hbm [resolvable:$true] %s1308
      %1314 = dma.vmem_to_hbm [thread:$0]  %s1307, 256, %s1309, [#allocation4], 128, 128, 8
    $region69: #{tpu_custom_call.1} parent=1 // pred_fallthru
      _
    // Predicated region
    $region70: #{tpu_custom_call.1} parent=1 // pred_check
      _
    $region71: #{tpu_custom_call.1} parent=1 // pred_check_branch
      %1316 = sbr.rel (0) target = $region73
    $region72: #{tpu_custom_call.1} parent=1 // pred_region
      %1318 = dma.done [#allocation4], 256
    $region73: #{tpu_custom_call.1} parent=1 // pred_fallthru
      _
    %1319 = vsyncpa [#allocation3], 1
    %1320 = vsyncpa [#allocation6], 1
    %1321 = vsyncpa [#allocation9], 1
    %1322 = vsyncpa [#allocation12], 1
    %1323 = vsyncpa [#allocation4], 1

</llo_original>
